<compile_context>
chip_gen: v6e
topology: v6e:2x2x1
jax: 0.10.0
libtpu: 0.0.40
codegen_flags: <defaults>
</compile_context>

<pallas_src>
import functools

import jax
import jax.numpy as jnp
from jax import lax
from jax.experimental import pallas as pl
from jax.experimental.pallas import tpu as pltpu


# ----------------------------------------------------------------------------
# Shared LSTM cell math (gates are pre-activation x@Wih + h@Whh + b).
# ----------------------------------------------------------------------------
def _lstm_cell(gates, c_prev):
    H = c_prev.shape[-1]
    i_g = jax.nn.sigmoid(gates[:, 0 * H:1 * H])
    f_g = jax.nn.sigmoid(gates[:, 1 * H:2 * H])
    g_g = jnp.tanh(gates[:, 2 * H:3 * H])
    o_g = jax.nn.sigmoid(gates[:, 3 * H:4 * H])
    c_new = f_g * c_prev + i_g * g_g
    h_new = o_g * jnp.tanh(c_new)
    return h_new, c_new


# ----------------------------------------------------------------------------
# BiLSTM encoder + decoder-init, single kernel, whole time loop inside.
# Inputs are time-major (L, B, *). Backward direction is handled by reversed
# indexing inside the loop (no jnp.flip, no concat).
# ----------------------------------------------------------------------------
def _bilstm_encoder_kernel(gxf_ref, gxb_ref, m_ref, whhf_ref, whhb_ref,
                           initw_ref, initb_ref,
                           encf_ref, encb_ref, init_ref,
                           hf_scr, cf_scr, hb_scr, cb_scr):
    L = gxf_ref.shape[0]
    H = hf_scr.shape[-1]

    hf_scr[...] = jnp.zeros_like(hf_scr)
    cf_scr[...] = jnp.zeros_like(cf_scr)
    hb_scr[...] = jnp.zeros_like(hb_scr)
    cb_scr[...] = jnp.zeros_like(cb_scr)

    whh_f = whhf_ref[...]            # (H, 4H), hoisted out of the loop
    whh_b = whhb_ref[...]

    @pl.loop(0, L)
    def _(t):
        tb = L - 1 - t

        # ---- forward direction (reads/writes position t) ----
        m_f = m_ref[t]                                       # (B, 1)
        h_f = hf_scr[...]
        gates_f = gxf_ref[t] + jnp.dot(h_f, whh_f,
                                       preferred_element_type=jnp.float32)
        hf_new, cf_new = _lstm_cell(gates_f, cf_scr[...])
        hf_upd = jnp.where(m_f > 0.0, hf_new, h_f)           # carry state on pad
        cf_upd = jnp.where(m_f > 0.0, cf_new, cf_scr[...])
        hf_scr[...] = hf_upd
        cf_scr[...] = cf_upd
        encf_ref[t] = hf_upd

        # ---- backward direction (reads/writes position L-1-t) ----
        m_b = m_ref[tb]
        h_b = hb_scr[...]
        gates_b = gxb_ref[tb] + jnp.dot(h_b, whh_b,
                                        preferred_element_type=jnp.float32)
        hb_new, cb_new = _lstm_cell(gates_b, cb_scr[...])
        hb_upd = jnp.where(m_b > 0.0, hb_new, h_b)
        cb_upd = jnp.where(m_b > 0.0, cb_new, cb_scr[...])
        hb_scr[...] = hb_upd
        cb_scr[...] = cb_upd
        encb_ref[tb] = hb_upd

    # ---- fused decoder-init: masked mean pool + Linear + tanh ----
    m = m_ref[...]                                           # (L, B, 1)
    hf_all = encf_ref[...]                                   # (L, B, H)
    hb_all = encb_ref[...]
    cnt = jnp.maximum(jnp.sum(m, axis=0), 1.0)               # (B, 1), NaN-guarded
    inv = 1.0 / cnt
    avg_f = jnp.sum(hf_all * m, axis=0) * inv                # (B, H)
    avg_b = jnp.sum(hb_all * m, axis=0) * inv                # (B, H)
    pre = (jnp.dot(avg_f, initw_ref[0:H, :], preferred_element_type=jnp.float32)
           + jnp.dot(avg_b, initw_ref[H:2 * H, :], preferred_element_type=jnp.float32)
           + initb_ref[...])
    init_ref[...] = jnp.tanh(pre)                            # (B, 2H)


def bilstm_encoder(gx_f, gx_b, mask_t, whh_f, whh_b, init_w_t, init_b):
    """gx_*: (Lx, B, 4H), mask_t: (Lx, B, 1) -> enc_f, enc_b (Lx,B,H), init (B,2H)."""
    Lx, B, G = gx_f.shape
    H = whh_f.shape[0]
    H2 = 2 * H
    return pl.pallas_call(
        _bilstm_encoder_kernel,
        out_shape=(jax.ShapeDtypeStruct((Lx, B, H), jnp.float32),
                   jax.ShapeDtypeStruct((Lx, B, H), jnp.float32),
                   jax.ShapeDtypeStruct((B, H2), jnp.float32)),
        grid_spec=pltpu.PrefetchScalarGridSpec(
            num_scalar_prefetch=0,
            grid=(1,),
            in_specs=[
                pl.BlockSpec((Lx, B, G), lambda i: (0, 0, 0)),
                pl.BlockSpec((Lx, B, G), lambda i: (0, 0, 0)),
                pl.BlockSpec((Lx, B, 1), lambda i: (0, 0, 0)),
                pl.BlockSpec((H, G), lambda i: (0, 0)),
                pl.BlockSpec((H, G), lambda i: (0, 0)),
                pl.BlockSpec((H2, H2), lambda i: (0, 0)),
                pl.BlockSpec((1, H2), lambda i: (0, 0)),
            ],
            out_specs=[
                pl.BlockSpec((Lx, B, H), lambda i: (0, 0, 0)),
                pl.BlockSpec((Lx, B, H), lambda i: (0, 0, 0)),
                pl.BlockSpec((B, H2), lambda i: (0, 0)),
            ],
            scratch_shapes=[pltpu.VMEM((B, H), jnp.float32)] * 4,
        ),
        compiler_params=pltpu.CompilerParams(
            dimension_semantics=("arbitrary",)),
    )(gx_f, gx_b, mask_t, whh_f, whh_b, init_w_t, init_b)


# ----------------------------------------------------------------------------
# Decoder LSTM, single kernel, whole time loop inside (no masking).
# ----------------------------------------------------------------------------
def _lstm_decoder_kernel(gx_ref, whh_ref, h0_ref, c0_ref, out_ref, h_scr, c_scr):
    L = gx_ref.shape[0]
    h_scr[...] = h0_ref[...]
    c_scr[...] = c0_ref[...]
    whh = whh_ref[...]

    @pl.loop(0, L)
    def _(t):
        gates = gx_ref[t] + jnp.dot(h_scr[...], whh,
                                    preferred_element_type=jnp.float32)
        h_new, c_new = _lstm_cell(gates, c_scr[...])
        h_scr[...] = h_new
        c_scr[...] = c_new
        out_ref[t] = h_new


def lstm_decoder(gx, whh, h0, c0):
    """gx: (Ly, B, 4H), h0/c0: (B, H) -> dec_h (Ly, B, H)."""
    Ly, B, G = gx.shape
    H = whh.shape[0]
    return pl.pallas_call(
        _lstm_decoder_kernel,
        out_shape=jax.ShapeDtypeStruct((Ly, B, H), jnp.float32),
        grid_spec=pltpu.PrefetchScalarGridSpec(
            num_scalar_prefetch=0,
            grid=(1,),
            in_specs=[
                pl.BlockSpec((Ly, B, G), lambda i: (0, 0, 0)),
                pl.BlockSpec((H, G), lambda i: (0, 0)),
                pl.BlockSpec((B, H), lambda i: (0, 0)),
                pl.BlockSpec((B, H), lambda i: (0, 0)),
            ],
            out_specs=pl.BlockSpec((Ly, B, H), lambda i: (0, 0, 0)),
            scratch_shapes=[pltpu.VMEM((B, H), jnp.float32)] * 2,
        ),
        compiler_params=pltpu.CompilerParams(
            dimension_semantics=("arbitrary",)),
    )(gx, whh, h0, c0)


# ----------------------------------------------------------------------------
# Fused: Luong attention + combiner + vocab projection + log_softmax + NLL sum.
# Grid over batch (parallel). Encoder states arrive as two halves (fwd/bwd) so
# the (B, Lx, 2H) concat never hits HBM; the context vector never hits HBM.
# ----------------------------------------------------------------------------
def _attn_score_kernel(dech_ref, encf_ref, encb_ref, m_ref, lab_ref,
                       watt_ref, wch_ref, wcc_ref, bc_ref, wp_ref,
                       out_ref, *, pad_id):
    H = encf_ref.shape[-1]
    q = dech_ref[0]          # (Ly, H)
    ef = encf_ref[0]         # (Lx, H)
    eb = encb_ref[0]         # (Lx, H)
    m = m_ref[0]             # (1, Lx)
    lab = lab_ref[0]         # (Ly, 1) int32

    # attention scores: (q @ W_att) . enc  (NT contraction, no in-kernel .T)
    qw = jnp.dot(q, watt_ref[...], preferred_element_type=jnp.float32)  # (Ly, 2H)
    nt = (((1,), (1,)), ((), ()))
    scores = (lax.dot_general(qw[:, :H], ef, nt, preferred_element_type=jnp.float32)
              + lax.dot_general(qw[:, H:], eb, nt, preferred_element_type=jnp.float32))

    scores = jnp.where(m > 0.0, scores, -1e30)
    scores = scores - jnp.max(scores, axis=-1, keepdims=True)
    e = jnp.exp(scores)
    attn = e * pl.reciprocal(jnp.sum(e, axis=-1, keepdims=True), approx=True)

    ctx_f = jnp.dot(attn, ef, preferred_element_type=jnp.float32)       # (Ly, H)
    ctx_b = jnp.dot(attn, eb, preferred_element_type=jnp.float32)       # (Ly, H)

    # combiner: Linear(3H -> E) on concat([dec_h, ctx_f, ctx_b]) as split matmuls
    wcc = wcc_ref[...]                                                  # (2H, E)
    pre = (jnp.dot(q, wch_ref[...], preferred_element_type=jnp.float32)
           + jnp.dot(ctx_f, wcc[:H, :], preferred_element_type=jnp.float32)
           + jnp.dot(ctx_b, wcc[H:, :], preferred_element_type=jnp.float32)
           + bc_ref[...])
    comb = jnp.tanh(pre)                                                # (Ly, E)

    logits = jnp.dot(comb, wp_ref[...], preferred_element_type=jnp.float32)  # (Ly, V)
    mx = jnp.max(logits, axis=-1, keepdims=True)
    lse = mx + jnp.log(jnp.sum(jnp.exp(logits - mx), axis=-1, keepdims=True))
    logp = logits - lse

    iota = lax.broadcasted_iota(jnp.int32, logp.shape, 1)
    onehot = (iota == lab).astype(jnp.float32)
    valid = (lab != pad_id).astype(jnp.float32)                         # (Ly, 1)
    tok_nll = -jnp.sum(logp * onehot, axis=-1, keepdims=True) * valid   # (Ly, 1)
    out_ref[0] = jnp.sum(tok_nll, axis=0, keepdims=True)                # (1, 1)


def attn_score(dec_h, enc_f, enc_b, src_mask, labels,
               w_att, comb_wh_t, comb_wc_t, comb_b, proj_w_t, pad_id):
    """dec_h: (B,Ly,H), enc_*: (B,Lx,H), src_mask: (B,1,Lx), labels: (B,Ly,1)."""
    B, Ly, H = dec_h.shape
    Lx = enc_f.shape[1]
    H2 = 2 * H
    E = comb_wh_t.shape[-1]
    V = proj_w_t.shape[-1]
    kernel = functools.partial(_attn_score_kernel, pad_id=pad_id)
    out = pl.pallas_call(
        kernel,
        out_shape=jax.ShapeDtypeStruct((B, 1, 1), jnp.float32),
        grid_spec=pltpu.PrefetchScalarGridSpec(
            num_scalar_prefetch=0,
            grid=(B,),
            in_specs=[
                pl.BlockSpec((1, Ly, H), lambda b: (b, 0, 0)),
                pl.BlockSpec((1, Lx, H), lambda b: (b, 0, 0)),
                pl.BlockSpec((1, Lx, H), lambda b: (b, 0, 0)),
                pl.BlockSpec((1, 1, Lx), lambda b: (b, 0, 0)),
                pl.BlockSpec((1, Ly, 1), lambda b: (b, 0, 0)),
                pl.BlockSpec((H, H2), lambda b: (0, 0)),
                pl.BlockSpec((H, E), lambda b: (0, 0)),
                pl.BlockSpec((H2, E), lambda b: (0, 0)),
                pl.BlockSpec((1, E), lambda b: (0, 0)),
                pl.BlockSpec((E, V), lambda b: (0, 0)),
            ],
            out_specs=pl.BlockSpec((1, 1, 1), lambda b: (b, 0, 0)),
        ),
        compiler_params=pltpu.CompilerParams(
            dimension_semantics=("parallel",)),
    )(dec_h, enc_f, enc_b, src_mask, labels,
      w_att, comb_wh_t, comb_wc_t, comb_b, proj_w_t)
    return out[:, 0, 0]                               # (B,)


# ----------------------------------------------------------------------------
# NMT forward (glue + kernels)
# ----------------------------------------------------------------------------
def nmt_forward(params, src_tokens, tgt_tokens, pad_id=0):
    H = params["enc_fwd_whh_t"].shape[0]

    tgt_in = tgt_tokens[:, :-1]                               # (B, Ly)
    tgt_lab = tgt_tokens[:, 1:]                               # (B, Ly)

    # embedding lookups, gathered directly into time-major (L, B, E) layout
    src_emb_t = jnp.take(params["src_embed"], src_tokens.T, axis=0)   # (Lx, B, E)
    tgt_emb_t = jnp.take(params["tgt_embed"], tgt_in.T, axis=0)       # (Ly, B, E)

    src_mask = (src_tokens != pad_id).astype(jnp.float32)             # (B, Lx)
    src_mask_t = src_mask.T[:, :, None]                               # (Lx, B, 1)

    # hoisted input projections: one MXU-saturating matmul per LSTM direction
    def in_proj(x_t, wih_t, b):
        L_, B_, E_ = x_t.shape
        g = jnp.dot(x_t.reshape(L_ * B_, E_), wih_t,
                    preferred_element_type=jnp.float32) + b
        return g.reshape(L_, B_, -1)

    gx_f = in_proj(src_emb_t, params["enc_fwd_wih_t"], params["enc_fwd_b"])
    gx_b = in_proj(src_emb_t, params["enc_bwd_wih_t"], params["enc_bwd_b"])
    gx_d = in_proj(tgt_emb_t, params["dec_wih_t"], params["dec_b"])

    # BiLSTM encoder + fused decoder-init (one kernel, whole time loop inside)
    enc_f, enc_b, init_state = bilstm_encoder(
        gx_f, gx_b, src_mask_t,
        params["enc_fwd_whh_t"], params["enc_bwd_whh_t"],
        params["init_w_t"], params["init_b"])

    h0, c0 = init_state[:, :H], init_state[:, H:]

    # decoder LSTM (one kernel, whole time loop inside)
    dec_h = lstm_decoder(gx_d, params["dec_whh_t"], h0, c0)           # (Ly, B, H)

    # batch-major views for the fused attention+score kernel
    dec_h_b = jnp.transpose(dec_h, (1, 0, 2))                         # (B, Ly, H)
    enc_f_b = jnp.transpose(enc_f, (1, 0, 2))                         # (B, Lx, H)
    enc_b_b = jnp.transpose(enc_b, (1, 0, 2))                         # (B, Lx, H)
    lab = tgt_lab.astype(jnp.int32)[:, :, None]                       # (B, Ly, 1)

    scores = attn_score(dec_h_b, enc_f_b, enc_b_b, src_mask[:, None, :], lab,
                        params["att_w"], params["comb_wh_t"], params["comb_wc_t"],
                        params["comb_b"], params["proj_w_t"], pad_id)
    return scores


# ----------------------------------------------------------------------------
# Deterministic parameter setup + example run
# ----------------------------------------------------------------------------
def make_params(key, E, H, Vsrc, Vtgt, pad_id=0):
    ks = jax.random.split(key, 20)
    n = lambda k, s: (jax.random.normal(k, s, jnp.float32) * 0.1)
    src_embed = n(ks[0], (Vsrc, E)).at[pad_id].set(0.0)
    tgt_embed = n(ks[1], (Vtgt, E)).at[pad_id].set(0.0)
    params = dict(
        src_embed=src_embed,
        tgt_embed=tgt_embed,
        enc_fwd_wih_t=n(ks[2], (E, 4 * H)),
        enc_fwd_whh_t=n(ks[3], (H, 4 * H)),
        enc_fwd_b=n(ks[4], (1, 4 * H)),
        enc_bwd_wih_t=n(ks[5], (E, 4 * H)),
        enc_bwd_whh_t=n(ks[6], (H, 4 * H)),
        enc_bwd_b=n(ks[7], (1, 4 * H)),
        dec_wih_t=n(ks[8], (E, 4 * H)),
        dec_whh_t=n(ks[9], (H, 4 * H)),
        dec_b=n(ks[10], (1, 4 * H)),
        init_w_t=n(ks[11], (2 * H, 2 * H)),
        init_b=n(ks[12], (1, 2 * H)),
        att_w=n(ks[13], (H, 2 * H)),
        comb_wh_t=n(ks[14], (H, E)),
        comb_wc_t=n(ks[15], (2 * H, E)),
        comb_b=n(ks[16], (1, E)),
        proj_w_t=n(ks[17], (E, Vtgt)),
    )
    return params


if __name__ == "__main__":
    E, H = 32, 32
    Vsrc, Vtgt = 48, 64
    B, Lx, Lt = 2, 10, 9       # target padded length 9 -> Ly = 8
    pad_id = 0

    key = jax.random.PRNGKey(0)
    kp, k1, k2 = jax.random.split(key, 3)
    params = make_params(kp, E, H, Vsrc, Vtgt, pad_id)

    # source tokens with trailing padding for the second example
    src = jax.random.randint(k1, (B, Lx), 1, Vsrc)
    src_lens = jnp.array([Lx, Lx - 3])
    src = jnp.where(jnp.arange(Lx)[None, :] < src_lens[:, None], src, pad_id)

    # target tokens: <s>=1 ... then padding
    tgt = jax.random.randint(k2, (B, Lt), 3, Vtgt)
    tgt_lens = jnp.array([Lt, Lt - 2])
    tgt = jnp.where(jnp.arange(Lt)[None, :] < tgt_lens[:, None], tgt, pad_id)
    tgt = tgt.at[:, 0].set(1)

    fwd = jax.jit(functools.partial(nmt_forward, pad_id=pad_id))
    scores = fwd(params, src, tgt)
    jax.block_until_ready(scores)
    assert scores.shape == (B,)
    print("KERNEL_OK")
</pallas_src>

<mosaic_0001>
module attributes {stable_mosaic.version = 11 : i64} {
  func.func @_bilstm_encoder_kernel(%arg0: i32, %arg1: memref<10x2x128xf32, #tpu.memory_space<vmem>>, %arg2: memref<10x2x128xf32, #tpu.memory_space<vmem>>, %arg3: memref<10x2x1xf32, #tpu.memory_space<vmem>>, %arg4: memref<32x128xf32, #tpu.memory_space<vmem>>, %arg5: memref<32x128xf32, #tpu.memory_space<vmem>>, %arg6: memref<64x64xf32, #tpu.memory_space<vmem>>, %arg7: memref<1x64xf32, #tpu.memory_space<vmem>>, %arg8: memref<10x2x32xf32, #tpu.memory_space<vmem>>, %arg9: memref<10x2x32xf32, #tpu.memory_space<vmem>>, %arg10: memref<2x64xf32, #tpu.memory_space<vmem>>, %arg11: memref<2x32xf32, #tpu.memory_space<vmem>>, %arg12: memref<2x32xf32, #tpu.memory_space<vmem>>, %arg13: memref<2x32xf32, #tpu.memory_space<vmem>>, %arg14: memref<2x32xf32, #tpu.memory_space<vmem>>) attributes {dimension_semantics = [#tpu.dimension_semantics<arbitrary>], iteration_bounds = array<i64: 1>, scalar_prefetch = 0 : i64, scratch_operands = 4 : i64, tpu.core_type = #tpu.core_type<tc>, window_params = [{pipeline_mode = #tpu.pipeline_mode<synchronous>, transform_indices = @transform_0, window_bounds = array<i64: 10, 2, 128>}, {pipeline_mode = #tpu.pipeline_mode<synchronous>, transform_indices = @transform_1, window_bounds = array<i64: 10, 2, 128>}, {pipeline_mode = #tpu.pipeline_mode<synchronous>, transform_indices = @transform_2, window_bounds = array<i64: 10, 2, 1>}, {pipeline_mode = #tpu.pipeline_mode<synchronous>, transform_indices = @transform_3, window_bounds = array<i64: 32, 128>}, {pipeline_mode = #tpu.pipeline_mode<synchronous>, transform_indices = @transform_4, window_bounds = array<i64: 32, 128>}, {pipeline_mode = #tpu.pipeline_mode<synchronous>, transform_indices = @transform_5, window_bounds = array<i64: 64, 64>}, {pipeline_mode = #tpu.pipeline_mode<synchronous>, transform_indices = @transform_6, window_bounds = array<i64: 1, 64>}, {pipeline_mode = #tpu.pipeline_mode<synchronous>, transform_indices = @transform_7, window_bounds = array<i64: 10, 2, 32>}, {pipeline_mode = #tpu.pipeline_mode<synchronous>, transform_indices = @transform_8, window_bounds = array<i64: 10, 2, 32>}, {pipeline_mode = #tpu.pipeline_mode<synchronous>, transform_indices = @transform_9, window_bounds = array<i64: 2, 64>}]} {
    %cst = arith.constant 0.000000e+00 : f32
    %0 = vector.broadcast %cst : f32 to vector<2x32xf32>
    %c0 = arith.constant 0 : index
    %c0_0 = arith.constant 0 : index
    %1 = vector.load %arg11[%c0, %c0_0] : memref<2x32xf32, #tpu.memory_space<vmem>>, vector<2x32xf32>
    tpu.vector_store %arg11[%c0, %c0_0], %0 {strides = array<i32>} : memref<2x32xf32, #tpu.memory_space<vmem>>, vector<2x32xf32>,
    %cst_1 = arith.constant 0.000000e+00 : f32
    %2 = vector.broadcast %cst_1 : f32 to vector<2x32xf32>
    %c0_2 = arith.constant 0 : index
    %c0_3 = arith.constant 0 : index
    %3 = vector.load %arg12[%c0_2, %c0_3] : memref<2x32xf32, #tpu.memory_space<vmem>>, vector<2x32xf32>
    tpu.vector_store %arg12[%c0_2, %c0_3], %2 {strides = array<i32>} : memref<2x32xf32, #tpu.memory_space<vmem>>, vector<2x32xf32>,
    %cst_4 = arith.constant 0.000000e+00 : f32
    %4 = vector.broadcast %cst_4 : f32 to vector<2x32xf32>
    %c0_5 = arith.constant 0 : index
    %c0_6 = arith.constant 0 : index
    %5 = vector.load %arg13[%c0_5, %c0_6] : memref<2x32xf32, #tpu.memory_space<vmem>>, vector<2x32xf32>
    tpu.vector_store %arg13[%c0_5, %c0_6], %4 {strides = array<i32>} : memref<2x32xf32, #tpu.memory_space<vmem>>, vector<2x32xf32>,
    %cst_7 = arith.constant 0.000000e+00 : f32
    %6 = vector.broadcast %cst_7 : f32 to vector<2x32xf32>
    %c0_8 = arith.constant 0 : index
    %c0_9 = arith.constant 0 : index
    %7 = vector.load %arg14[%c0_8, %c0_9] : memref<2x32xf32, #tpu.memory_space<vmem>>, vector<2x32xf32>
    tpu.vector_store %arg14[%c0_8, %c0_9], %6 {strides = array<i32>} : memref<2x32xf32, #tpu.memory_space<vmem>>, vector<2x32xf32>,
    %c0_10 = arith.constant 0 : index
    %c0_11 = arith.constant 0 : index
    %8 = vector.load %arg4[%c0_10, %c0_11] : memref<32x128xf32, #tpu.memory_space<vmem>>, vector<32x128xf32>
    %c0_12 = arith.constant 0 : index
    %c0_13 = arith.constant 0 : index
    %9 = vector.load %arg5[%c0_12, %c0_13] : memref<32x128xf32, #tpu.memory_space<vmem>>, vector<32x128xf32>
    %c0_i32 = arith.constant 0 : i32
    %c10_i32 = arith.constant 10 : i32
    %10 = arith.addi %c0_i32, %c10_i32 : i32
    %c1_i32 = arith.constant 1 : i32
    scf.for %arg15 = %c0_i32 to %10 step %c1_i32  : i32 {
      %c1_i32_38 = arith.constant 1 : i32
      %39 = arith.muli %arg15, %c1_i32_38 : i32
      %c0_i32_39 = arith.constant 0 : i32
      %40 = arith.addi %c0_i32_39, %39 : i32
      %c9_i32 = arith.constant 9 : i32
      %41 = arith.subi %c9_i32, %40 : i32
      %42 = arith.index_cast %40 : i32 to index
      %c0_40 = arith.constant 0 : index
      %c0_41 = arith.constant 0 : index
      %43 = vector.load %arg3[%42, %c0_40, %c0_41] : memref<10x2x1xf32, #tpu.memory_space<vmem>>, vector<1x2x1xf32>
      %44 = vector.shape_cast %43 : vector<1x2x1xf32> to vector<2x1xf32>
      %c0_42 = arith.constant 0 : index
      %c0_43 = arith.constant 0 : index
      %45 = vector.load %arg11[%c0_42, %c0_43] : memref<2x32xf32, #tpu.memory_space<vmem>>, vector<2x32xf32>
      %46 = arith.index_cast %40 : i32 to index
      %c0_44 = arith.constant 0 : index
      %c0_45 = arith.constant 0 : index
      %47 = vector.load %arg1[%46, %c0_44, %c0_45] : memref<10x2x128xf32, #tpu.memory_space<vmem>>, vector<1x2x128xf32>
      %48 = vector.shape_cast %47 : vector<1x2x128xf32> to vector<2x128xf32>
      %cst_46 = arith.constant dense<0.000000e+00> : vector<2x128xf32>
      %49 = tpu.matmul %45, %8, %cst_46 {dimension_numbers = #tpu.dot_dimension_numbers<[1], [0], [0], [1], [0, 0, 1, 1], [], []>} : vector<2x32xf32>, vector<32x128xf32>, vector<2x128xf32> -> vector<2x128xf32>
      %50 = arith.addf %48, %49 : vector<2x128xf32>
      %c0_47 = arith.constant 0 : index
      %c0_48 = arith.constant 0 : index
      %51 = vector.load %arg12[%c0_47, %c0_48] : memref<2x32xf32, #tpu.memory_space<vmem>>, vector<2x32xf32>
      %52 = vector.extract_strided_slice %50 {offsets = [0, 0], sizes = [2, 32], strides = [1, 1]} : vector<2x128xf32> to vector<2x32xf32>
      %53 = arith.negf %52 : vector<2x32xf32>
      %54 = math.exp %53 : vector<2x32xf32>
      %cst_49 = arith.constant 1.000000e+00 : f32
      %55 = vector.broadcast %cst_49 : f32 to vector<2x32xf32>
      %56 = arith.addf %55, %54 : vector<2x32xf32>
      %57 = arith.divf %55, %56 : vector<2x32xf32>
      %58 = vector.extract_strided_slice %50 {offsets = [0, 32], sizes = [2, 32], strides = [1, 1]} : vector<2x128xf32> to vector<2x32xf32>
      %59 = arith.negf %58 : vector<2x32xf32>
      %60 = math.exp %59 : vector<2x32xf32>
      %cst_50 = arith.constant 1.000000e+00 : f32
      %61 = vector.broadcast %cst_50 : f32 to vector<2x32xf32>
      %62 = arith.addf %61, %60 : vector<2x32xf32>
      %63 = arith.divf %61, %62 : vector<2x32xf32>
      %64 = vector.extract_strided_slice %50 {offsets = [0, 64], sizes = [2, 32], strides = [1, 1]} : vector<2x128xf32> to vector<2x32xf32>
      %65 = math.tanh %64 : vector<2x32xf32>
      %66 = vector.extract_strided_slice %50 {offsets = [0, 96], sizes = [2, 32], strides = [1, 1]} : vector<2x128xf32> to vector<2x32xf32>
      %67 = arith.negf %66 : vector<2x32xf32>
      %68 = math.exp %67 : vector<2x32xf32>
      %cst_51 = arith.constant 1.000000e+00 : f32
      %69 = vector.broadcast %cst_51 : f32 to vector<2x32xf32>
      %70 = arith.addf %69, %68 : vector<2x32xf32>
      %71 = arith.divf %69, %70 : vector<2x32xf32>
      %72 = arith.mulf %63, %51 : vector<2x32xf32>
      %73 = arith.mulf %57, %65 : vector<2x32xf32>
      %74 = arith.addf %72, %73 : vector<2x32xf32>
      %75 = math.tanh %74 : vector<2x32xf32>
      %76 = arith.mulf %71, %75 : vector<2x32xf32>
      %cst_52 = arith.constant 0.000000e+00 : f32
      %77 = vector.broadcast %cst_52 : f32 to vector<2x1xf32>
      %78 = arith.cmpf ogt, %44, %77 : vector<2x1xf32>
      %79 = vector.shape_cast %78 : vector<2x1xi1> to vector<2x1xi1>
      %80 = vector.broadcast %79 : vector<2x1xi1> to vector<2x32xi1>
      %81 = arith.select %80, %76, %45 : vector<2x32xi1>, vector<2x32xf32>
      %cst_53 = arith.constant 0.000000e+00 : f32
      %82 = vector.broadcast %cst_53 : f32 to vector<2x1xf32>
      %83 = arith.cmpf ogt, %44, %82 : vector<2x1xf32>
      %c0_54 = arith.constant 0 : index
      %c0_55 = arith.constant 0 : index
      %84 = vector.load %arg12[%c0_54, %c0_55] : memref<2x32xf32, #tpu.memory_space<vmem>>, vector<2x32xf32>
      %85 = vector.shape_cast %83 : vector<2x1xi1> to vector<2x1xi1>
      %86 = vector.broadcast %85 : vector<2x1xi1> to vector<2x32xi1>
      %87 = arith.select %86, %74, %84 : vector<2x32xi1>, vector<2x32xf32>
      %c0_56 = arith.constant 0 : index
      %c0_57 = arith.constant 0 : index
      %88 = vector.load %arg11[%c0_56, %c0_57] : memref<2x32xf32, #tpu.memory_space<vmem>>, vector<2x32xf32>
      tpu.vector_store %arg11[%c0_56, %c0_57], %81 {strides = array<i32>} : memref<2x32xf32, #tpu.memory_space<vmem>>, vector<2x32xf32>,
      %c0_58 = arith.constant 0 : index
      %c0_59 = arith.constant 0 : index
      %89 = vector.load %arg12[%c0_58, %c0_59] : memref<2x32xf32, #tpu.memory_space<vmem>>, vector<2x32xf32>
      tpu.vector_store %arg12[%c0_58, %c0_59], %87 {strides = array<i32>} : memref<2x32xf32, #tpu.memory_space<vmem>>, vector<2x32xf32>,
      %90 = arith.index_cast %40 : i32 to index
      %c0_60 = arith.constant 0 : index
      %c0_61 = arith.constant 0 : index
      %91 = vector.load %arg8[%90, %c0_60, %c0_61] : memref<10x2x32xf32, #tpu.memory_space<vmem>>, vector<1x2x32xf32>
      %92 = vector.shape_cast %91 : vector<1x2x32xf32> to vector<2x32xf32>
      %93 = vector.shape_cast %81 : vector<2x32xf32> to vector<1x2x32xf32>
      tpu.vector_store %arg8[%90, %c0_60, %c0_61], %93 {strides = array<i32>} : memref<10x2x32xf32, #tpu.memory_space<vmem>>, vector<1x2x32xf32>,
      %94 = arith.index_cast %41 : i32 to index
      %c0_62 = arith.constant 0 : index
      %c0_63 = arith.constant 0 : index
      %95 = vector.load %arg3[%94, %c0_62, %c0_63] : memref<10x2x1xf32, #tpu.memory_space<vmem>>, vector<1x2x1xf32>
      %96 = vector.shape_cast %95 : vector<1x2x1xf32> to vector<2x1xf32>
      %c0_64 = arith.constant 0 : index
      %c0_65 = arith.constant 0 : index
      %97 = vector.load %arg13[%c0_64, %c0_65] : memref<2x32xf32, #tpu.memory_space<vmem>>, vector<2x32xf32>
      %98 = arith.index_cast %41 : i32 to index
      %c0_66 = arith.constant 0 : index
      %c0_67 = arith.constant 0 : index
      %99 = vector.load %arg2[%98, %c0_66, %c0_67] : memref<10x2x128xf32, #tpu.memory_space<vmem>>, vector<1x2x128xf32>
      %100 = vector.shape_cast %99 : vector<1x2x128xf32> to vector<2x128xf32>
      %cst_68 = arith.constant dense<0.000000e+00> : vector<2x128xf32>
      %101 = tpu.matmul %97, %9, %cst_68 {dimension_numbers = #tpu.dot_dimension_numbers<[1], [0], [0], [1], [0, 0, 1, 1], [], []>} : vector<2x32xf32>, vector<32x128xf32>, vector<2x128xf32> -> vector<2x128xf32>
      %102 = arith.addf %100, %101 : vector<2x128xf32>
      %c0_69 = arith.constant 0 : index
      %c0_70 = arith.constant 0 : index
      %103 = vector.load %arg14[%c0_69, %c0_70] : memref<2x32xf32, #tpu.memory_space<vmem>>, vector<2x32xf32>
      %104 = vector.extract_strided_slice %102 {offsets = [0, 0], sizes = [2, 32], strides = [1, 1]} : vector<2x128xf32> to vector<2x32xf32>
      %105 = arith.negf %104 : vector<2x32xf32>
      %106 = math.exp %105 : vector<2x32xf32>
      %cst_71 = arith.constant 1.000000e+00 : f32
      %107 = vector.broadcast %cst_71 : f32 to vector<2x32xf32>
      %108 = arith.addf %107, %106 : vector<2x32xf32>
      %109 = arith.divf %107, %108 : vector<2x32xf32>
      %110 = vector.extract_strided_slice %102 {offsets = [0, 32], sizes = [2, 32], strides = [1, 1]} : vector<2x128xf32> to vector<2x32xf32>
      %111 = arith.negf %110 : vector<2x32xf32>
      %112 = math.exp %111 : vector<2x32xf32>
      %cst_72 = arith.constant 1.000000e+00 : f32
      %113 = vector.broadcast %cst_72 : f32 to vector<2x32xf32>
      %114 = arith.addf %113, %112 : vector<2x32xf32>
      %115 = arith.divf %113, %114 : vector<2x32xf32>
      %116 = vector.extract_strided_slice %102 {offsets = [0, 64], sizes = [2, 32], strides = [1, 1]} : vector<2x128xf32> to vector<2x32xf32>
      %117 = math.tanh %116 : vector<2x32xf32>
      %118 = vector.extract_strided_slice %102 {offsets = [0, 96], sizes = [2, 32], strides = [1, 1]} : vector<2x128xf32> to vector<2x32xf32>
      %119 = arith.negf %118 : vector<2x32xf32>
      %120 = math.exp %119 : vector<2x32xf32>
      %cst_73 = arith.constant 1.000000e+00 : f32
      %121 = vector.broadcast %cst_73 : f32 to vector<2x32xf32>
      %122 = arith.addf %121, %120 : vector<2x32xf32>
      %123 = arith.divf %121, %122 : vector<2x32xf32>
      %124 = arith.mulf %115, %103 : vector<2x32xf32>
      %125 = arith.mulf %109, %117 : vector<2x32xf32>
      %126 = arith.addf %124, %125 : vector<2x32xf32>
      %127 = math.tanh %126 : vector<2x32xf32>
      %128 = arith.mulf %123, %127 : vector<2x32xf32>
      %cst_74 = arith.constant 0.000000e+00 : f32
      %129 = vector.broadcast %cst_74 : f32 to vector<2x1xf32>
      %130 = arith.cmpf ogt, %96, %129 : vector<2x1xf32>
      %131 = vector.shape_cast %130 : vector<2x1xi1> to vector<2x1xi1>
      %132 = vector.broadcast %131 : vector<2x1xi1> to vector<2x32xi1>
      %133 = arith.select %132, %128, %97 : vector<2x32xi1>, vector<2x32xf32>
      %cst_75 = arith.constant 0.000000e+00 : f32
      %134 = vector.broadcast %cst_75 : f32 to vector<2x1xf32>
      %135 = arith.cmpf ogt, %96, %134 : vector<2x1xf32>
      %c0_76 = arith.constant 0 : index
      %c0_77 = arith.constant 0 : index
      %136 = vector.load %arg14[%c0_76, %c0_77] : memref<2x32xf32, #tpu.memory_space<vmem>>, vector<2x32xf32>
      %137 = vector.shape_cast %135 : vector<2x1xi1> to vector<2x1xi1>
      %138 = vector.broadcast %137 : vector<2x1xi1> to vector<2x32xi1>
      %139 = arith.select %138, %126, %136 : vector<2x32xi1>, vector<2x32xf32>
      %c0_78 = arith.constant 0 : index
      %c0_79 = arith.constant 0 : index
      %140 = vector.load %arg13[%c0_78, %c0_79] : memref<2x32xf32, #tpu.memory_space<vmem>>, vector<2x32xf32>
      tpu.vector_store %arg13[%c0_78, %c0_79], %133 {strides = array<i32>} : memref<2x32xf32, #tpu.memory_space<vmem>>, vector<2x32xf32>,
      %c0_80 = arith.constant 0 : index
      %c0_81 = arith.constant 0 : index
      %141 = vector.load %arg14[%c0_80, %c0_81] : memref<2x32xf32, #tpu.memory_space<vmem>>, vector<2x32xf32>
      tpu.vector_store %arg14[%c0_80, %c0_81], %139 {strides = array<i32>} : memref<2x32xf32, #tpu.memory_space<vmem>>, vector<2x32xf32>,
      %142 = arith.index_cast %41 : i32 to index
      %c0_82 = arith.constant 0 : index
      %c0_83 = arith.constant 0 : index
      %143 = vector.load %arg9[%142, %c0_82, %c0_83] : memref<10x2x32xf32, #tpu.memory_space<vmem>>, vector<1x2x32xf32>
      %144 = vector.shape_cast %143 : vector<1x2x32xf32> to vector<2x32xf32>
      %145 = vector.shape_cast %133 : vector<2x32xf32> to vector<1x2x32xf32>
      tpu.vector_store %arg9[%142, %c0_82, %c0_83], %145 {strides = array<i32>} : memref<10x2x32xf32, #tpu.memory_space<vmem>>, vector<1x2x32xf32>,
    }
    %c10_i32_14 = arith.constant 10 : i32
    %c0_15 = arith.constant 0 : index
    %c0_16 = arith.constant 0 : index
    %c0_17 = arith.constant 0 : index
    %11 = vector.load %arg3[%c0_15, %c0_16, %c0_17] : memref<10x2x1xf32, #tpu.memory_space<vmem>>, vector<10x2x1xf32>
    %c0_18 = arith.constant 0 : index
    %c0_19 = arith.constant 0 : index
    %c0_20 = arith.constant 0 : index
    %12 = vector.load %arg8[%c0_18, %c0_19, %c0_20] : memref<10x2x32xf32, #tpu.memory_space<vmem>>, vector<10x2x32xf32>
    %c0_21 = arith.constant 0 : index
    %c0_22 = arith.constant 0 : index
    %c0_23 = arith.constant 0 : index
    %13 = vector.load %arg9[%c0_21, %c0_22, %c0_23] : memref<10x2x32xf32, #tpu.memory_space<vmem>>, vector<10x2x32xf32>
    %cst_24 = arith.constant dense<0.000000e+00> : vector<2x1xf32>
    %14 = vector.multi_reduction <add>, %11, %cst_24 [0] : vector<10x2x1xf32> to vector<2x1xf32>
    %cst_25 = arith.constant 1.000000e+00 : f32
    %15 = vector.broadcast %cst_25 : f32 to vector<2x1xf32>
    %16 = arith.maximumf %14, %15 : vector<2x1xf32>
    %cst_26 = arith.constant 1.000000e+00 : f32
    %17 = vector.broadcast %cst_26 : f32 to vector<2x1xf32>
    %18 = arith.divf %17, %16 : vector<2x1xf32>
    %19 = vector.broadcast %11 : vector<10x2x1xf32> to vector<10x2x32xf32>
    %20 = arith.mulf %12, %19 : vector<10x2x32xf32>
    %cst_27 = arith.constant dense<0.000000e+00> : vector<2x32xf32>
    %21 = vector.multi_reduction <add>, %20, %cst_27 [0] : vector<10x2x32xf32> to vector<2x32xf32>
    %22 = vector.broadcast %18 : vector<2x1xf32> to vector<2x32xf32>
    %23 = arith.mulf %21, %22 : vector<2x32xf32>
    %24 = vector.broadcast %11 : vector<10x2x1xf32> to vector<10x2x32xf32>
    %25 = arith.mulf %13, %24 : vector<10x2x32xf32>
    %cst_28 = arith.constant dense<0.000000e+00> : vector<2x32xf32>
    %26 = vector.multi_reduction <add>, %25, %cst_28 [0] : vector<10x2x32xf32> to vector<2x32xf32>
    %27 = vector.broadcast %18 : vector<2x1xf32> to vector<2x32xf32>
    %28 = arith.mulf %26, %27 : vector<2x32xf32>
    %c0_29 = arith.constant 0 : index
    %c0_30 = arith.constant 0 : index
    %29 = vector.load %arg6[%c0_29, %c0_30] : memref<64x64xf32, #tpu.memory_space<vmem>>, vector<32x64xf32>
    %cst_31 = arith.constant dense<0.000000e+00> : vector<2x64xf32>
    %30 = tpu.matmul %23, %29, %cst_31 {dimension_numbers = #tpu.dot_dimension_numbers<[1], [0], [0], [1], [0, 0, 1, 1], [], []>} : vector<2x32xf32>, vector<32x64xf32>, vector<2x64xf32> -> vector<2x64xf32>
    %c32 = arith.constant 32 : index
    %c0_32 = arith.constant 0 : index
    %31 = vector.load %arg6[%c32, %c0_32] : memref<64x64xf32, #tpu.memory_space<vmem>>, vector<32x64xf32>
    %cst_33 = arith.constant dense<0.000000e+00> : vector<2x64xf32>
    %32 = tpu.matmul %28, %31, %cst_33 {dimension_numbers = #tpu.dot_dimension_numbers<[1], [0], [0], [1], [0, 0, 1, 1], [], []>} : vector<2x32xf32>, vector<32x64xf32>, vector<2x64xf32> -> vector<2x64xf32>
    %33 = arith.addf %30, %32 : vector<2x64xf32>
    %c0_34 = arith.constant 0 : index
    %c0_35 = arith.constant 0 : index
    %34 = vector.load %arg7[%c0_34, %c0_35] : memref<1x64xf32, #tpu.memory_space<vmem>>, vector<1x64xf32>
    %35 = vector.broadcast %34 : vector<1x64xf32> to vector<2x64xf32>
    %36 = arith.addf %33, %35 : vector<2x64xf32>
    %37 = math.tanh %36 : vector<2x64xf32>
    %c0_36 = arith.constant 0 : index
    %c0_37 = arith.constant 0 : index
    %38 = vector.load %arg10[%c0_36, %c0_37] : memref<2x64xf32, #tpu.memory_space<vmem>>, vector<2x64xf32>
    tpu.vector_store %arg10[%c0_36, %c0_37], %37 {strides = array<i32>} : memref<2x64xf32, #tpu.memory_space<vmem>>, vector<2x64xf32>,
    return
  }
  func.func @transform_0(%arg0: i32) -> (i32, i32, i32) {
    %c0_i32 = arith.constant 0 : i32
    %c0_i32_0 = arith.constant 0 : i32
    %c0_i32_1 = arith.constant 0 : i32
    %c0_i32_2 = arith.constant 0 : i32
    return %c0_i32, %c0_i32_0, %c0_i32_1 : i32, i32, i32
  }
  func.func @transform_1(%arg0: i32) -> (i32, i32, i32) {
    %c0_i32 = arith.constant 0 : i32
    %c0_i32_0 = arith.constant 0 : i32
    %c0_i32_1 = arith.constant 0 : i32
    %c0_i32_2 = arith.constant 0 : i32
    return %c0_i32, %c0_i32_0, %c0_i32_1 : i32, i32, i32
  }
  func.func @transform_2(%arg0: i32) -> (i32, i32, i32) {
    %c0_i32 = arith.constant 0 : i32
    %c0_i32_0 = arith.constant 0 : i32
    %c0_i32_1 = arith.constant 0 : i32
    %c0_i32_2 = arith.constant 0 : i32
    return %c0_i32, %c0_i32_0, %c0_i32_1 : i32, i32, i32
  }
  func.func @transform_3(%arg0: i32) -> (i32, i32) {
    %c0_i32 = arith.constant 0 : i32
    %c0_i32_0 = arith.constant 0 : i32
    %c0_i32_1 = arith.constant 0 : i32
    return %c0_i32, %c0_i32_0 : i32, i32
  }
  func.func @transform_4(%arg0: i32) -> (i32, i32) {
    %c0_i32 = arith.constant 0 : i32
    %c0_i32_0 = arith.constant 0 : i32
    %c0_i32_1 = arith.constant 0 : i32
    return %c0_i32, %c0_i32_0 : i32, i32
  }
  func.func @transform_5(%arg0: i32) -> (i32, i32) {
    %c0_i32 = arith.constant 0 : i32
    %c0_i32_0 = arith.constant 0 : i32
    %c0_i32_1 = arith.constant 0 : i32
    return %c0_i32, %c0_i32_0 : i32, i32
  }
  func.func @transform_6(%arg0: i32) -> (i32, i32) {
    %c0_i32 = arith.constant 0 : i32
    %c0_i32_0 = arith.constant 0 : i32
    %c0_i32_1 = arith.constant 0 : i32
    return %c0_i32, %c0_i32_0 : i32, i32
  }
  func.func @transform_7(%arg0: i32) -> (i32, i32, i32) {
    %c0_i32 = arith.constant 0 : i32
    %c0_i32_0 = arith.constant 0 : i32
    %c0_i32_1 = arith.constant 0 : i32
    %c0_i32_2 = arith.constant 0 : i32
    return %c0_i32, %c0_i32_0, %c0_i32_1 : i32, i32, i32
  }
  func.func @transform_8(%arg0: i32) -> (i32, i32, i32) {
    %c0_i32 = arith.constant 0 : i32
    %c0_i32_0 = arith.constant 0 : i32
    %c0_i32_1 = arith.constant 0 : i32
    %c0_i32_2 = arith.constant 0 : i32
    return %c0_i32, %c0_i32_0, %c0_i32_1 : i32, i32, i32
  }
  func.func @transform_9(%arg0: i32) -> (i32, i32) {
    %c0_i32 = arith.constant 0 : i32
    %c0_i32_0 = arith.constant 0 : i32
    %c0_i32_1 = arith.constant 0 : i32
    return %c0_i32, %c0_i32_0 : i32, i32
  }
}

module attributes {stable_mosaic.version = 11 : i64} {
  func.func @_lstm_decoder_kernel(%arg0: i32, %arg1: memref<8x2x128xf32, #tpu.memory_space<vmem>>, %arg2: memref<32x128xf32, #tpu.memory_space<vmem>>, %arg3: memref<2x32xf32, #tpu.memory_space<vmem>>, %arg4: memref<2x32xf32, #tpu.memory_space<vmem>>, %arg5: memref<8x2x32xf32, #tpu.memory_space<vmem>>, %arg6: memref<2x32xf32, #tpu.memory_space<vmem>>, %arg7: memref<2x32xf32, #tpu.memory_space<vmem>>) attributes {dimension_semantics = [#tpu.dimension_semantics<arbitrary>], iteration_bounds = array<i64: 1>, scalar_prefetch = 0 : i64, scratch_operands = 2 : i64, tpu.core_type = #tpu.core_type<tc>, window_params = [{pipeline_mode = #tpu.pipeline_mode<synchronous>, transform_indices = @transform_0, window_bounds = array<i64: 8, 2, 128>}, {pipeline_mode = #tpu.pipeline_mode<synchronous>, transform_indices = @transform_1, window_bounds = array<i64: 32, 128>}, {pipeline_mode = #tpu.pipeline_mode<synchronous>, transform_indices = @transform_2, window_bounds = array<i64: 2, 32>}, {pipeline_mode = #tpu.pipeline_mode<synchronous>, transform_indices = @transform_3, window_bounds = array<i64: 2, 32>}, {pipeline_mode = #tpu.pipeline_mode<synchronous>, transform_indices = @transform_4, window_bounds = array<i64: 8, 2, 32>}]} {
    %c0 = arith.constant 0 : index
    %c0_0 = arith.constant 0 : index
    %0 = vector.load %arg3[%c0, %c0_0] : memref<2x32xf32, #tpu.memory_space<vmem>>, vector<2x32xf32>
    %c0_1 = arith.constant 0 : index
    %c0_2 = arith.constant 0 : index
    %1 = vector.load %arg6[%c0_1, %c0_2] : memref<2x32xf32, #tpu.memory_space<vmem>>, vector<2x32xf32>
    tpu.vector_store %arg6[%c0_1, %c0_2], %0 {strides = array<i32>} : memref<2x32xf32, #tpu.memory_space<vmem>>, vector<2x32xf32>,
    %c0_3 = arith.constant 0 : index
    %c0_4 = arith.constant 0 : index
    %2 = vector.load %arg4[%c0_3, %c0_4] : memref<2x32xf32, #tpu.memory_space<vmem>>, vector<2x32xf32>
    %c0_5 = arith.constant 0 : index
    %c0_6 = arith.constant 0 : index
    %3 = vector.load %arg7[%c0_5, %c0_6] : memref<2x32xf32, #tpu.memory_space<vmem>>, vector<2x32xf32>
    tpu.vector_store %arg7[%c0_5, %c0_6], %2 {strides = array<i32>} : memref<2x32xf32, #tpu.memory_space<vmem>>, vector<2x32xf32>,
    %c0_7 = arith.constant 0 : index
    %c0_8 = arith.constant 0 : index
    %4 = vector.load %arg2[%c0_7, %c0_8] : memref<32x128xf32, #tpu.memory_space<vmem>>, vector<32x128xf32>
    %c0_i32 = arith.constant 0 : i32
    %c8_i32 = arith.constant 8 : i32
    %5 = arith.addi %c0_i32, %c8_i32 : i32
    %c1_i32 = arith.constant 1 : i32
    scf.for %arg8 = %c0_i32 to %5 step %c1_i32  : i32 {
      %c1_i32_10 = arith.constant 1 : i32
      %6 = arith.muli %arg8, %c1_i32_10 : i32
      %c0_i32_11 = arith.constant 0 : i32
      %7 = arith.addi %c0_i32_11, %6 : i32
      %8 = arith.index_cast %7 : i32 to index
      %c0_12 = arith.constant 0 : index
      %c0_13 = arith.constant 0 : index
      %9 = vector.load %arg1[%8, %c0_12, %c0_13] : memref<8x2x128xf32, #tpu.memory_space<vmem>>, vector<1x2x128xf32>
      %10 = vector.shape_cast %9 : vector<1x2x128xf32> to vector<2x128xf32>
      %c0_14 = arith.constant 0 : index
      %c0_15 = arith.constant 0 : index
      %11 = vector.load %arg6[%c0_14, %c0_15] : memref<2x32xf32, #tpu.memory_space<vmem>>, vector<2x32xf32>
      %cst = arith.constant dense<0.000000e+00> : vector<2x128xf32>
      %12 = tpu.matmul %11, %4, %cst {dimension_numbers = #tpu.dot_dimension_numbers<[1], [0], [0], [1], [0, 0, 1, 1], [], []>} : vector<2x32xf32>, vector<32x128xf32>, vector<2x128xf32> -> vector<2x128xf32>
      %13 = arith.addf %10, %12 : vector<2x128xf32>
      %c0_16 = arith.constant 0 : index
      %c0_17 = arith.constant 0 : index
      %14 = vector.load %arg7[%c0_16, %c0_17] : memref<2x32xf32, #tpu.memory_space<vmem>>, vector<2x32xf32>
      %15 = vector.extract_strided_slice %13 {offsets = [0, 0], sizes = [2, 32], strides = [1, 1]} : vector<2x128xf32> to vector<2x32xf32>
      %16 = arith.negf %15 : vector<2x32xf32>
      %17 = math.exp %16 : vector<2x32xf32>
      %cst_18 = arith.constant 1.000000e+00 : f32
      %18 = vector.broadcast %cst_18 : f32 to vector<2x32xf32>
      %19 = arith.addf %18, %17 : vector<2x32xf32>
      %20 = arith.divf %18, %19 : vector<2x32xf32>
      %21 = vector.extract_strided_slice %13 {offsets = [0, 32], sizes = [2, 32], strides = [1, 1]} : vector<2x128xf32> to vector<2x32xf32>
      %22 = arith.negf %21 : vector<2x32xf32>
      %23 = math.exp %22 : vector<2x32xf32>
      %cst_19 = arith.constant 1.000000e+00 : f32
      %24 = vector.broadcast %cst_19 : f32 to vector<2x32xf32>
      %25 = arith.addf %24, %23 : vector<2x32xf32>
      %26 = arith.divf %24, %25 : vector<2x32xf32>
      %27 = vector.extract_strided_slice %13 {offsets = [0, 64], sizes = [2, 32], strides = [1, 1]} : vector<2x128xf32> to vector<2x32xf32>
      %28 = math.tanh %27 : vector<2x32xf32>
      %29 = vector.extract_strided_slice %13 {offsets = [0, 96], sizes = [2, 32], strides = [1, 1]} : vector<2x128xf32> to vector<2x32xf32>
      %30 = arith.negf %29 : vector<2x32xf32>
      %31 = math.exp %30 : vector<2x32xf32>
      %cst_20 = arith.constant 1.000000e+00 : f32
      %32 = vector.broadcast %cst_20 : f32 to vector<2x32xf32>
      %33 = arith.addf %32, %31 : vector<2x32xf32>
      %34 = arith.divf %32, %33 : vector<2x32xf32>
      %35 = arith.mulf %26, %14 : vector<2x32xf32>
      %36 = arith.mulf %20, %28 : vector<2x32xf32>
      %37 = arith.addf %35, %36 : vector<2x32xf32>
      %38 = math.tanh %37 : vector<2x32xf32>
      %39 = arith.mulf %34, %38 : vector<2x32xf32>
      %c0_21 = arith.constant 0 : index
      %c0_22 = arith.constant 0 : index
      %40 = vector.load %arg6[%c0_21, %c0_22] : memref<2x32xf32, #tpu.memory_space<vmem>>, vector<2x32xf32>
      tpu.vector_store %arg6[%c0_21, %c0_22], %39 {strides = array<i32>} : memref<2x32xf32, #tpu.memory_space<vmem>>, vector<2x32xf32>,
      %c0_23 = arith.constant 0 : index
      %c0_24 = arith.constant 0 : index
      %41 = vector.load %arg7[%c0_23, %c0_24] : memref<2x32xf32, #tpu.memory_space<vmem>>, vector<2x32xf32>
      tpu.vector_store %arg7[%c0_23, %c0_24], %37 {strides = array<i32>} : memref<2x32xf32, #tpu.memory_space<vmem>>, vector<2x32xf32>,
      %42 = arith.index_cast %7 : i32 to index
      %c0_25 = arith.constant 0 : index
      %c0_26 = arith.constant 0 : index
      %43 = vector.load %arg5[%42, %c0_25, %c0_26] : memref<8x2x32xf32, #tpu.memory_space<vmem>>, vector<1x2x32xf32>
      %44 = vector.shape_cast %43 : vector<1x2x32xf32> to vector<2x32xf32>
      %45 = vector.shape_cast %39 : vector<2x32xf32> to vector<1x2x32xf32>
      tpu.vector_store %arg5[%42, %c0_25, %c0_26], %45 {strides = array<i32>} : memref<8x2x32xf32, #tpu.memory_space<vmem>>, vector<1x2x32xf32>,
    }
    %c8_i32_9 = arith.constant 8 : i32
    return
  }
  func.func @transform_0(%arg0: i32) -> (i32, i32, i32) {
    %c0_i32 = arith.constant 0 : i32
    %c0_i32_0 = arith.constant 0 : i32
    %c0_i32_1 = arith.constant 0 : i32
    %c0_i32_2 = arith.constant 0 : i32
    return %c0_i32, %c0_i32_0, %c0_i32_1 : i32, i32, i32
  }
  func.func @transform_1(%arg0: i32) -> (i32, i32) {
    %c0_i32 = arith.constant 0 : i32
    %c0_i32_0 = arith.constant 0 : i32
    %c0_i32_1 = arith.constant 0 : i32
    return %c0_i32, %c0_i32_0 : i32, i32
  }
  func.func @transform_2(%arg0: i32) -> (i32, i32) {
    %c0_i32 = arith.constant 0 : i32
    %c0_i32_0 = arith.constant 0 : i32
    %c0_i32_1 = arith.constant 0 : i32
    return %c0_i32, %c0_i32_0 : i32, i32
  }
  func.func @transform_3(%arg0: i32) -> (i32, i32) {
    %c0_i32 = arith.constant 0 : i32
    %c0_i32_0 = arith.constant 0 : i32
    %c0_i32_1 = arith.constant 0 : i32
    return %c0_i32, %c0_i32_0 : i32, i32
  }
  func.func @transform_4(%arg0: i32) -> (i32, i32, i32) {
    %c0_i32 = arith.constant 0 : i32
    %c0_i32_0 = arith.constant 0 : i32
    %c0_i32_1 = arith.constant 0 : i32
    %c0_i32_2 = arith.constant 0 : i32
    return %c0_i32, %c0_i32_0, %c0_i32_1 : i32, i32, i32
  }
}

module attributes {stable_mosaic.version = 11 : i64} {
  func.func @_attn_score_kernel(%arg0: i32, %arg1: memref<1x8x32xf32, #tpu.memory_space<vmem>>, %arg2: memref<1x10x32xf32, #tpu.memory_space<vmem>>, %arg3: memref<1x10x32xf32, #tpu.memory_space<vmem>>, %arg4: memref<1x1x10xf32, #tpu.memory_space<vmem>>, %arg5: memref<1x8x1xi32, #tpu.memory_space<vmem>>, %arg6: memref<32x64xf32, #tpu.memory_space<vmem>>, %arg7: memref<32x32xf32, #tpu.memory_space<vmem>>, %arg8: memref<64x32xf32, #tpu.memory_space<vmem>>, %arg9: memref<1x32xf32, #tpu.memory_space<vmem>>, %arg10: memref<32x64xf32, #tpu.memory_space<vmem>>, %arg11: memref<1x1x1xf32, #tpu.memory_space<vmem>>) attributes {dimension_semantics = [#tpu.dimension_semantics<parallel>], iteration_bounds = array<i64: 2>, scalar_prefetch = 0 : i64, scratch_operands = 0 : i64, tpu.core_type = #tpu.core_type<tc>, window_params = [{transform_indices = @transform_0, window_bounds = array<i64: 1, 8, 32>}, {transform_indices = @transform_1, window_bounds = array<i64: 1, 10, 32>}, {transform_indices = @transform_2, window_bounds = array<i64: 1, 10, 32>}, {transform_indices = @transform_3, window_bounds = array<i64: 1, 1, 10>}, {transform_indices = @transform_4, window_bounds = array<i64: 1, 8, 1>}, {pipeline_mode = #tpu.pipeline_mode<synchronous>, transform_indices = @transform_5, window_bounds = array<i64: 32, 64>}, {pipeline_mode = #tpu.pipeline_mode<synchronous>, transform_indices = @transform_6, window_bounds = array<i64: 32, 32>}, {pipeline_mode = #tpu.pipeline_mode<synchronous>, transform_indices = @transform_7, window_bounds = array<i64: 64, 32>}, {pipeline_mode = #tpu.pipeline_mode<synchronous>, transform_indices = @transform_8, window_bounds = array<i64: 1, 32>}, {pipeline_mode = #tpu.pipeline_mode<synchronous>, transform_indices = @transform_9, window_bounds = array<i64: 32, 64>}, {transform_indices = @transform_10, window_bounds = array<i64: 1, 1, 1>}]} {
    %c0 = arith.constant 0 : index
    %c0_0 = arith.constant 0 : index
    %c0_1 = arith.constant 0 : index
    %0 = vector.load %arg1[%c0, %c0_0, %c0_1] : memref<1x8x32xf32, #tpu.memory_space<vmem>>, vector<1x8x32xf32>
    %1 = vector.shape_cast %0 : vector<1x8x32xf32> to vector<8x32xf32>
    %c0_2 = arith.constant 0 : index
    %c0_3 = arith.constant 0 : index
    %c0_4 = arith.constant 0 : index
    %2 = vector.load %arg2[%c0_2, %c0_3, %c0_4] : memref<1x10x32xf32, #tpu.memory_space<vmem>>, vector<1x10x32xf32>
    %3 = vector.shape_cast %2 : vector<1x10x32xf32> to vector<10x32xf32>
    %c0_5 = arith.constant 0 : index
    %c0_6 = arith.constant 0 : index
    %c0_7 = arith.constant 0 : index
    %4 = vector.load %arg3[%c0_5, %c0_6, %c0_7] : memref<1x10x32xf32, #tpu.memory_space<vmem>>, vector<1x10x32xf32>
    %5 = vector.shape_cast %4 : vector<1x10x32xf32> to vector<10x32xf32>
    %c0_8 = arith.constant 0 : index
    %c0_9 = arith.constant 0 : index
    %c0_10 = arith.constant 0 : index
    %6 = vector.load %arg4[%c0_8, %c0_9, %c0_10] : memref<1x1x10xf32, #tpu.memory_space<vmem>>, vector<1x1x10xf32>
    %7 = vector.shape_cast %6 : vector<1x1x10xf32> to vector<1x10xf32>
    %c0_11 = arith.constant 0 : index
    %c0_12 = arith.constant 0 : index
    %c0_13 = arith.constant 0 : index
    %8 = vector.load %arg5[%c0_11, %c0_12, %c0_13] : memref<1x8x1xi32, #tpu.memory_space<vmem>>, vector<1x8x1xi32>
    %9 = vector.shape_cast %8 : vector<1x8x1xi32> to vector<8x1xi32>
    %c0_14 = arith.constant 0 : index
    %c0_15 = arith.constant 0 : index
    %10 = vector.load %arg6[%c0_14, %c0_15] : memref<32x64xf32, #tpu.memory_space<vmem>>, vector<32x64xf32>
    %cst = arith.constant dense<0.000000e+00> : vector<8x64xf32>
    %11 = tpu.matmul %1, %10, %cst {dimension_numbers = #tpu.dot_dimension_numbers<[1], [0], [0], [1], [0, 0, 1, 1], [], []>} : vector<8x32xf32>, vector<32x64xf32>, vector<8x64xf32> -> vector<8x64xf32>
    %12 = vector.extract_strided_slice %11 {offsets = [0, 0], sizes = [8, 32], strides = [1, 1]} : vector<8x64xf32> to vector<8x32xf32>
    %cst_16 = arith.constant dense<0.000000e+00> : vector<8x10xf32>
    %13 = tpu.matmul %12, %3, %cst_16 {dimension_numbers = #tpu.dot_dimension_numbers<[1], [1], [0], [0], [0, 0, 1, 0], [], []>} : vector<8x32xf32>, vector<10x32xf32>, vector<8x10xf32> -> vector<8x10xf32>
    %14 = vector.extract_strided_slice %11 {offsets = [0, 32], sizes = [8, 32], strides = [1, 1]} : vector<8x64xf32> to vector<8x32xf32>
    %cst_17 = arith.constant dense<0.000000e+00> : vector<8x10xf32>
    %15 = tpu.matmul %14, %5, %cst_17 {dimension_numbers = #tpu.dot_dimension_numbers<[1], [1], [0], [0], [0, 0, 1, 0], [], []>} : vector<8x32xf32>, vector<10x32xf32>, vector<8x10xf32> -> vector<8x10xf32>
    %16 = arith.addf %13, %15 : vector<8x10xf32>
    %cst_18 = arith.constant 0.000000e+00 : f32
    %17 = vector.broadcast %cst_18 : f32 to vector<1x10xf32>
    %18 = arith.cmpf ogt, %7, %17 : vector<1x10xf32>
    %cst_19 = arith.constant -1.000000e+30 : f32
    %19 = vector.shape_cast %18 : vector<1x10xi1> to vector<1x10xi1>
    %20 = vector.broadcast %19 : vector<1x10xi1> to vector<8x10xi1>
    %21 = vector.broadcast %cst_19 : f32 to vector<8x10xf32>
    %22 = arith.select %20, %16, %21 : vector<8x10xi1>, vector<8x10xf32>
    %cst_20 = arith.constant dense<0xFF800000> : vector<8xf32>
    %23 = vector.multi_reduction <maximumf>, %22, %cst_20 [1] : vector<8x10xf32> to vector<8xf32>
    %24 = vector.shape_cast %23 : vector<8xf32> to vector<8x1xf32>
    %25 = vector.broadcast %24 : vector<8x1xf32> to vector<8x10xf32>
    %26 = arith.subf %22, %25 : vector<8x10xf32>
    %27 = math.exp %26 : vector<8x10xf32>
    %cst_21 = arith.constant dense<0.000000e+00> : vector<8xf32>
    %28 = vector.multi_reduction <add>, %27, %cst_21 [1] : vector<8x10xf32> to vector<8xf32>
    %29 = vector.shape_cast %28 : vector<8xf32> to vector<8x1xf32>
    %30 = tpu.reciprocal %29 {approx = true} : vector<8x1xf32> -> vector<8x1xf32>
    %31 = vector.broadcast %30 : vector<8x1xf32> to vector<8x10xf32>
    %32 = arith.mulf %27, %31 : vector<8x10xf32>
    %cst_22 = arith.constant dense<0.000000e+00> : vector<8x32xf32>
    %33 = tpu.matmul %32, %3, %cst_22 {dimension_numbers = #tpu.dot_dimension_numbers<[1], [0], [0], [1], [0, 0, 1, 1], [], []>} : vector<8x10xf32>, vector<10x32xf32>, vector<8x32xf32> -> vector<8x32xf32>
    %cst_23 = arith.constant dense<0.000000e+00> : vector<8x32xf32>
    %34 = tpu.matmul %32, %5, %cst_23 {dimension_numbers = #tpu.dot_dimension_numbers<[1], [0], [0], [1], [0, 0, 1, 1], [], []>} : vector<8x10xf32>, vector<10x32xf32>, vector<8x32xf32> -> vector<8x32xf32>
    %c0_24 = arith.constant 0 : index
    %c0_25 = arith.constant 0 : index
    %35 = vector.load %arg8[%c0_24, %c0_25] : memref<64x32xf32, #tpu.memory_space<vmem>>, vector<64x32xf32>
    %c0_26 = arith.constant 0 : index
    %c0_27 = arith.constant 0 : index
    %36 = vector.load %arg7[%c0_26, %c0_27] : memref<32x32xf32, #tpu.memory_space<vmem>>, vector<32x32xf32>
    %cst_28 = arith.constant dense<0.000000e+00> : vector<8x32xf32>
    %37 = tpu.matmul %1, %36, %cst_28 {dimension_numbers = #tpu.dot_dimension_numbers<[1], [0], [0], [1], [0, 0, 1, 1], [], []>} : vector<8x32xf32>, vector<32x32xf32>, vector<8x32xf32> -> vector<8x32xf32>
    %38 = vector.extract_strided_slice %35 {offsets = [0, 0], sizes = [32, 32], strides = [1, 1]} : vector<64x32xf32> to vector<32x32xf32>
    %cst_29 = arith.constant dense<0.000000e+00> : vector<8x32xf32>
    %39 = tpu.matmul %33, %38, %cst_29 {dimension_numbers = #tpu.dot_dimension_numbers<[1], [0], [0], [1], [0, 0, 1, 1], [], []>} : vector<8x32xf32>, vector<32x32xf32>, vector<8x32xf32> -> vector<8x32xf32>
    %40 = arith.addf %37, %39 : vector<8x32xf32>
    %41 = vector.extract_strided_slice %35 {offsets = [32, 0], sizes = [32, 32], strides = [1, 1]} : vector<64x32xf32> to vector<32x32xf32>
    %cst_30 = arith.constant dense<0.000000e+00> : vector<8x32xf32>
    %42 = tpu.matmul %34, %41, %cst_30 {dimension_numbers = #tpu.dot_dimension_numbers<[1], [0], [0], [1], [0, 0, 1, 1], [], []>} : vector<8x32xf32>, vector<32x32xf32>, vector<8x32xf32> -> vector<8x32xf32>
    %43 = arith.addf %40, %42 : vector<8x32xf32>
    %c0_31 = arith.constant 0 : index
    %c0_32 = arith.constant 0 : index
    %44 = vector.load %arg9[%c0_31, %c0_32] : memref<1x32xf32, #tpu.memory_space<vmem>>, vector<1x32xf32>
    %45 = vector.broadcast %44 : vector<1x32xf32> to vector<8x32xf32>
    %46 = arith.addf %43, %45 : vector<8x32xf32>
    %47 = math.tanh %46 : vector<8x32xf32>
    %c0_33 = arith.constant 0 : index
    %c0_34 = arith.constant 0 : index
    %48 = vector.load %arg10[%c0_33, %c0_34] : memref<32x64xf32, #tpu.memory_space<vmem>>, vector<32x64xf32>
    %cst_35 = arith.constant dense<0.000000e+00> : vector<8x64xf32>
    %49 = tpu.matmul %47, %48, %cst_35 {dimension_numbers = #tpu.dot_dimension_numbers<[1], [0], [0], [1], [0, 0, 1, 1], [], []>} : vector<8x32xf32>, vector<32x64xf32>, vector<8x64xf32> -> vector<8x64xf32>
    %cst_36 = arith.constant dense<0xFF800000> : vector<8xf32>
    %50 = vector.multi_reduction <maximumf>, %49, %cst_36 [1] : vector<8x64xf32> to vector<8xf32>
    %51 = vector.shape_cast %50 : vector<8xf32> to vector<8x1xf32>
    %52 = vector.broadcast %51 : vector<8x1xf32> to vector<8x64xf32>
    %53 = arith.subf %49, %52 : vector<8x64xf32>
    %54 = math.exp %53 : vector<8x64xf32>
    %cst_37 = arith.constant dense<0.000000e+00> : vector<8xf32>
    %55 = vector.multi_reduction <add>, %54, %cst_37 [1] : vector<8x64xf32> to vector<8xf32>
    %56 = vector.shape_cast %55 : vector<8xf32> to vector<8x1xf32>
    %57 = math.log %56 : vector<8x1xf32>
    %58 = arith.addf %51, %57 : vector<8x1xf32>
    %59 = vector.broadcast %58 : vector<8x1xf32> to vector<8x64xf32>
    %60 = arith.subf %49, %59 : vector<8x64xf32>
    %61 = tpu.iota {dimensions = array<i32: 1>} : vector<8x64xi32>
    %62 = vector.broadcast %9 : vector<8x1xi32> to vector<8x64xi32>
    %63 = arith.cmpi eq, %61, %62 : vector<8x64xi32>
    %64 = arith.extui %63 : vector<8x64xi1> to vector<8x64xi32>
    %65 = arith.sitofp %64 : vector<8x64xi32> to vector<8x64xf32>
    %c0_i32 = arith.constant 0 : i32
    %66 = vector.broadcast %c0_i32 : i32 to vector<8x1xi32>
    %67 = arith.cmpi ne, %9, %66 : vector<8x1xi32>
    %68 = arith.extui %67 : vector<8x1xi1> to vector<8x1xi32>
    %69 = arith.sitofp %68 : vector<8x1xi32> to vector<8x1xf32>
    %70 = arith.mulf %60, %65 : vector<8x64xf32>
    %cst_38 = arith.constant dense<0.000000e+00> : vector<8xf32>
    %71 = vector.multi_reduction <add>, %70, %cst_38 [1] : vector<8x64xf32> to vector<8xf32>
    %72 = vector.shape_cast %71 : vector<8xf32> to vector<8x1xf32>
    %cst_39 = arith.constant 0.000000e+00 : f32
    %73 = vector.broadcast %cst_39 : f32 to vector<8x1xf32>
    %74 = arith.subf %73, %72 : vector<8x1xf32>
    %75 = arith.mulf %74, %69 : vector<8x1xf32>
    %cst_40 = arith.constant dense<0.000000e+00> : vector<1xf32>
    %76 = vector.multi_reduction <add>, %75, %cst_40 [0] : vector<8x1xf32> to vector<1xf32>
    %77 = vector.shape_cast %76 : vector<1xf32> to vector<1x1xf32>
    %c0_41 = arith.constant 0 : index
    %c0_42 = arith.constant 0 : index
    %c0_43 = arith.constant 0 : index
    %78 = vector.load %arg11[%c0_41, %c0_42, %c0_43] : memref<1x1x1xf32, #tpu.memory_space<vmem>>, vector<1x1x1xf32>
    %79 = vector.shape_cast %78 : vector<1x1x1xf32> to vector<1x1xf32>
    %80 = vector.shape_cast %77 : vector<1x1xf32> to vector<1x1x1xf32>
    tpu.vector_store %arg11[%c0_41, %c0_42, %c0_43], %80 {strides = array<i32>} : memref<1x1x1xf32, #tpu.memory_space<vmem>>, vector<1x1x1xf32>,
    return
  }
  func.func @transform_0(%arg0: i32) -> (i32, i32, i32) {
    %c0_i32 = arith.constant 0 : i32
    %c0_i32_0 = arith.constant 0 : i32
    %c0_i32_1 = arith.constant 0 : i32
    return %arg0, %c0_i32, %c0_i32_0 : i32, i32, i32
  }
  func.func @transform_1(%arg0: i32) -> (i32, i32, i32) {
    %c0_i32 = arith.constant 0 : i32
    %c0_i32_0 = arith.constant 0 : i32
    %c0_i32_1 = arith.constant 0 : i32
    return %arg0, %c0_i32, %c0_i32_0 : i32, i32, i32
  }
  func.func @transform_2(%arg0: i32) -> (i32, i32, i32) {
    %c0_i32 = arith.constant 0 : i32
    %c0_i32_0 = arith.constant 0 : i32
    %c0_i32_1 = arith.constant 0 : i32
    return %arg0, %c0_i32, %c0_i32_0 : i32, i32, i32
  }
  func.func @transform_3(%arg0: i32) -> (i32, i32, i32) {
    %c0_i32 = arith.constant 0 : i32
    %c0_i32_0 = arith.constant 0 : i32
    %c0_i32_1 = arith.constant 0 : i32
    return %arg0, %c0_i32, %c0_i32_0 : i32, i32, i32
  }
  func.func @transform_4(%arg0: i32) -> (i32, i32, i32) {
    %c0_i32 = arith.constant 0 : i32
    %c0_i32_0 = arith.constant 0 : i32
    %c0_i32_1 = arith.constant 0 : i32
    return %arg0, %c0_i32, %c0_i32_0 : i32, i32, i32
  }
  func.func @transform_5(%arg0: i32) -> (i32, i32) {
    %c0_i32 = arith.constant 0 : i32
    %c0_i32_0 = arith.constant 0 : i32
    %c0_i32_1 = arith.constant 0 : i32
    return %c0_i32, %c0_i32_0 : i32, i32
  }
  func.func @transform_6(%arg0: i32) -> (i32, i32) {
    %c0_i32 = arith.constant 0 : i32
    %c0_i32_0 = arith.constant 0 : i32
    %c0_i32_1 = arith.constant 0 : i32
    return %c0_i32, %c0_i32_0 : i32, i32
  }
  func.func @transform_7(%arg0: i32) -> (i32, i32) {
    %c0_i32 = arith.constant 0 : i32
    %c0_i32_0 = arith.constant 0 : i32
    %c0_i32_1 = arith.constant 0 : i32
    return %c0_i32, %c0_i32_0 : i32, i32
  }
  func.func @transform_8(%arg0: i32) -> (i32, i32) {
    %c0_i32 = arith.constant 0 : i32
    %c0_i32_0 = arith.constant 0 : i32
    %c0_i32_1 = arith.constant 0 : i32
    return %c0_i32, %c0_i32_0 : i32, i32
  }
  func.func @transform_9(%arg0: i32) -> (i32, i32) {
    %c0_i32 = arith.constant 0 : i32
    %c0_i32_0 = arith.constant 0 : i32
    %c0_i32_1 = arith.constant 0 : i32
    return %c0_i32, %c0_i32_0 : i32, i32
  }
  func.func @transform_10(%arg0: i32) -> (i32, i32, i32) {
    %c0_i32 = arith.constant 0 : i32
    %c0_i32_0 = arith.constant 0 : i32
    %c0_i32_1 = arith.constant 0 : i32
    return %arg0, %c0_i32, %c0_i32_0 : i32, i32, i32
  }
}

</mosaic_0001>

<llo_original>
// kernel: nmt_forward.4
$region0: #{nmt_forward.4}
  #allocation0 [shape = 'u32[]', space=smem, size = 0x4, offset = 0x4, fixed_abs, tag = 'smem constant byte address 0x4 - core index']
  #allocation1 [shape = 'u32[144,128]{1,0:T(1,128)}', space=vmem, size = 0x12000, scoped, tag = 'internal scratch']
  #allocation2 [shape = 'f32[2,32]{1,0:T(2,128)}', space=vmem, size = 0x400, scoped, tag = 'scratch operand']
  #allocation3 [shape = 'f32[2,32]{1,0:T(2,128)}', space=vmem, size = 0x400, scoped, tag = 'scratch operand']
  %s0 = inlined_call_operand.vmem [shape: f32[8,2,128], index: 0, kind: input, shape index: {}]
  %s1 = inlined_call_operand.vmem [shape: f32[32,128], index: 1, kind: input, shape index: {}]
  %s2 = inlined_call_operand.vmem [shape: f32[2,32], index: 2, kind: input, shape index: {}]
  %s3 = inlined_call_operand.vmem [shape: f32[2,32], index: 3, kind: input, shape index: {}]
  %s4 = inlined_call_operand.vmem [shape: f32[8,2,32], index: 4, kind: output, shape index: {}]
  %s5 = sld [smem:[#allocation0]]
  $region33: #{nmt_forward.4} parent=0
    _
  %s7 = ssub.s32 1, %s5
  %s8 = scalar_select 0, %s7, %s5
  // Predicated region
  $region2: #{nmt_forward.4} parent=0 // pred_check
    _
  $region3: #{nmt_forward.4} parent=0 // pred_check_branch
    %10 = sbr.rel (0) target = $region5
  $region4: #{nmt_forward.4} parent=0 // pred_region
    _
  $region5: #{nmt_forward.4} parent=0 // pred_fallthru
    _
  // Predicated region
  $region6: #{nmt_forward.4} parent=0 // pred_check
    _
  $region7: #{nmt_forward.4} parent=0 // pred_check_branch
    %12 = sbr.rel (0) target = $region9
  $region8: #{nmt_forward.4} parent=0 // pred_region
    _
  $region9: #{nmt_forward.4} parent=0 // pred_fallthru
    _
  // Predicated region
  $region10: #{nmt_forward.4} parent=0 // pred_check
    _
  $region11: #{nmt_forward.4} parent=0 // pred_check_branch
    %14 = sbr.rel (0) target = $region13
  $region12: #{nmt_forward.4} parent=0 // pred_region
    _
  $region13: #{nmt_forward.4} parent=0 // pred_fallthru
    _
  // Predicated region
  $region14: #{nmt_forward.4} parent=0 // pred_check
    _
  $region15: #{nmt_forward.4} parent=0 // pred_check_branch
    %16 = sbr.rel (0) target = $region17
  $region16: #{nmt_forward.4} parent=0 // pred_region
    _
  $region17: #{nmt_forward.4} parent=0 // pred_fallthru
    _
  %v17 = vld [vmem:[%s2] sm:$0x3]
  %vm18 = vcmask 254976
  %19 = vst.msk [vmem:[#allocation2] sm:$0x3] %vm18, %v17
  %v20 = vld [vmem:[%s3] sm:$0x3]
  %21 = vst.msk [vmem:[#allocation3] sm:$0x3] %vm18, %v20
  %v22 = vld [vmem:[%s1] sm:$0xff]
  %v23 = vld [vmem:[%s1 + $0x8] sm:$0xff]
  %v24 = vld [vmem:[%s1 + $0x10] sm:$0xff]
  %v25 = vld [vmem:[%s1 + $0x18] sm:$0xff]
  loop: start=0, step=1, limit=8
  $region18: #{nmt_forward.4} parent=0 // loop_pre_header
    _
  $region19: #{nmt_forward.4} parent=0 // loop_header
    %s27 = sphi 0, %s31
    %p28 = scmp.ge.s32.totalorder %s27, 8
  $region20: #{nmt_forward.4} parent=0 // loop_header_branch
    %30 = sbr.rel (%p28) target = $region24
  $region21: #{nmt_forward.4} parent=0 // loop_body
    %s32 = smul.u32 %s27, 2
    %s33 = scalar_lea.vmem %s0, %s32
    %v34 = vld [vmem:[%s33] sm:$0x3]
    %v35 = vld [vmem:[#allocation2] sm:$0x3]
    %vm36 = vcmask 261120
    %v38 = vsel %vm36, %v35, 0
    %40 = vmatprep.subr.mxu0 0.0
    %41 = vmatpush1.msra.mxu0 0.0
    %42 = vmatprep.subr.mxu0 0.0
    %43 = vmatpush1.msra.mxu0 0.0
    %44 = vmatprep.subr.mxu0 0.0
    %45 = vmatpush1.msra.mxu0 0.0
    %46 = vmatprep.subr.mxu0 0.0
    %47 = vmatpush1.msra.mxu0 0.0
    %48 = vmatprep.subr.mxu0 0.0
    %49 = vmatpush1.msra.mxu0 0.0
    %50 = vmatprep.subr.mxu0 0.0
    %51 = vmatpush1.msra.mxu0 0.0
    %52 = vmatprep.subr.mxu0 0.0
    %53 = vmatpush1.msra.mxu0 0.0
    %54 = vmatprep.subr.mxu0 0.0
    %55 = vmatpush1.msra.mxu0 0.0
    %56 = vmatprep.subr.mxu0 0.0
    %57 = vmatpush1.msra.mxu0 0.0
    %58 = vmatprep.subr.mxu0 0.0
    %59 = vmatpush1.msra.mxu0 0.0
    %60 = vmatprep.subr.mxu0 0.0
    %61 = vmatpush1.msra.mxu0 0.0
    %62 = vmatprep.subr.mxu0 0.0
    %63 = vmatpush1.msra.mxu0 0.0
    %64 = vmatprep.subr.mxu0 0.0
    %65 = vmatpush1.msra.mxu0 %v25
    %66 = vmatprep.subr.mxu0 0.0
    %67 = vmatpush1.msra.mxu0 %v24
    %68 = vmatprep.subr.mxu0 0.0
    %69 = vmatpush1.msra.mxu0 %v23
    %70 = vmatprep.subr.mxu0 0.0
    %71 = vmatpush1.msra.mxu0 %v22
    %72 = vmatprep.subr.mxu0 0.0
    %73 = vmatpush2.msra.mxu0 0.0
    %74 = vmatprep.subr.mxu0 0.0
    %75 = vmatpush2.msra.mxu0 0.0
    %76 = vmatprep.subr.mxu0 0.0
    %77 = vmatpush2.msra.mxu0 0.0
    %78 = vmatprep.subr.mxu0 0.0
    %79 = vmatpush2.msra.mxu0 0.0
    %80 = vmatprep.subr.mxu0 0.0
    %81 = vmatpush2.msra.mxu0 0.0
    %82 = vmatprep.subr.mxu0 0.0
    %83 = vmatpush2.msra.mxu0 0.0
    %84 = vmatprep.subr.mxu0 0.0
    %85 = vmatpush2.msra.mxu0 0.0
    %86 = vmatprep.subr.mxu0 0.0
    %87 = vmatpush2.msra.mxu0 0.0
    %88 = vmatprep.subr.mxu0 0.0
    %89 = vmatpush2.msra.mxu0 0.0
    %90 = vmatprep.subr.mxu0 0.0
    %91 = vmatpush2.msra.mxu0 0.0
    %92 = vmatprep.subr.mxu0 0.0
    %93 = vmatpush2.msra.mxu0 0.0
    %94 = vmatprep.subr.mxu0 0.0
    %95 = vmatpush2.msra.mxu0 0.0
    %96 = vmatprep.subr.mxu0 0.0
    %97 = vmatpush2.msra.mxu0 0.0
    %98 = vmatprep.subr.mxu0 0.0
    %99 = vmatpush2.msra.mxu0 0.0
    %100 = vmatprep.subr.mxu0 0.0
    %101 = vmatpush2.msra.mxu0 0.0
    %102 = vmatprep.subr.mxu0 0.0
    %103 = vmatpush2.msra.mxu0 0.0
    %104 = vmatprep.mubr.f32.mxu0 0.0
    %105 = vmatmul.mubr.f32.gmra.mxu0 %v38
    %v106 = vpop.f32.mrf.mxu0
    %v107 = vadd.f32 0.0, %v106
    %v108 = vpop.f32.mrf.mxu0
    %109 = vdwg.mxu0
    %v110 = vadd.f32 %v34, %v107
    %v111 = vld [vmem:[#allocation3] sm:$0x3]
    %v112 = vxor.u32 %v110, 2147483648
    %v113 = vmul.f32 %v112, 1.442695
    %v114 = vpow.pop %v113
    %v115 = vadd.f32 %v114, 1.0
    %v116 = vrcp.pop %v115
    %v117 = vmul.f32 1.0, %v116
    %v118 = vtanh.pop %v110
    %120 = vrot.lane.b32.xlu0 %v111, 32
    %v121 = vpop.permute.xlu0 %120
    %v123 = vmul.f32 %v117, %v121
    %125 = vrot.lane.b32.xlu0 %v118, 64
    %v126 = vpop.permute.xlu0 %125
    %v128 = vmul.f32 %v117, %v126
    %130 = vrot.lane.b32.xlu0 %v128, 32
    %v131 = vpop.permute.xlu0 %130
    %v133 = vadd.f32 %v123, %v131
    %v134 = vtanh.pop %v133
    %136 = vrot.lane.b32.xlu0 %v134, 64
    %v137 = vpop.permute.xlu0 %136
    %v139 = vmul.f32 %v117, %v137
    %141 = vrot.lane.b32.xlu0 %v139, 32
    %v142 = vpop.permute.xlu0 %141
    %144 = vst.msk [vmem:[#allocation2] sm:$0x3] %vm18, %v142
    %146 = vrot.lane.b32.xlu0 %v133, 96
    %v147 = vpop.permute.xlu0 %146
    %149 = vst.msk [vmem:[#allocation3] sm:$0x3] %vm18, %v147
    %s150 = scalar_lea.vmem %s4, %s32
    %151 = vst.msk [vmem:[%s150] sm:$0x3] %vm18, %v142
  $region22: #{nmt_forward.4} parent=0 // loop_footer
    %s31 = sadd.s32 1, %s27
  $region23: #{nmt_forward.4} parent=0 // loop_footer_branch
    %26 = sbr.rel target = $region19
  $region24: #{nmt_forward.4} parent=0 // loop_exit
    _
  // Predicated region
  $region25: #{nmt_forward.4} parent=0 // pred_check
    _
  $region26: #{nmt_forward.4} parent=0 // pred_check_branch
    %153 = sbr.rel (0) target = $region28
  $region27: #{nmt_forward.4} parent=0 // pred_region
    _
  $region28: #{nmt_forward.4} parent=0 // pred_fallthru
    _
  // Predicated region
  $region29: #{nmt_forward.4} parent=0 // pred_check
    _
  $region30: #{nmt_forward.4} parent=0 // pred_check_branch
    %155 = sbr.rel (0) target = $region32
  $region31: #{nmt_forward.4} parent=0 // pred_region
    _
  $region32: #{nmt_forward.4} parent=0 // pred_fallthru
    _

// kernel: nmt_forward.3
$region0: #{nmt_forward.3}
  #allocation0 [shape = 'u32[]', space=smem, size = 0x4, offset = 0x4, fixed_abs, tag = 'smem constant byte address 0x4 - core index']
  #allocation1 [shape = 'u32[144,128]{1,0:T(1,128)}', space=vmem, size = 0x12000, scoped, tag = 'internal scratch']
  #allocation2 [shape = 'f32[2,32]{1,0:T(2,128)}', space=vmem, size = 0x400, scoped, tag = 'scratch operand']
  #allocation3 [shape = 'f32[2,32]{1,0:T(2,128)}', space=vmem, size = 0x400, scoped, tag = 'scratch operand']
  #allocation4 [shape = 'f32[2,32]{1,0:T(2,128)}', space=vmem, size = 0x400, scoped, tag = 'scratch operand']
  #allocation5 [shape = 'f32[2,32]{1,0:T(2,128)}', space=vmem, size = 0x400, scoped, tag = 'scratch operand']
  %s0 = inlined_call_operand.vmem [shape: f32[10,2,128], index: 0, kind: input, shape index: {}]
  %s1 = inlined_call_operand.vmem [shape: f32[10,2,128], index: 1, kind: input, shape index: {}]
  %s2 = inlined_call_operand.vmem [shape: f32[10,2,1], index: 2, kind: input, shape index: {}]
  %s3 = inlined_call_operand.vmem [shape: f32[32,128], index: 3, kind: input, shape index: {}]
  %s4 = inlined_call_operand.vmem [shape: f32[32,128], index: 4, kind: input, shape index: {}]
  %s5 = inlined_call_operand.vmem [shape: f32[64,64], index: 5, kind: input, shape index: {}]
  %s6 = inlined_call_operand.vmem [shape: f32[1,64], index: 6, kind: input, shape index: {}]
  %s7 = inlined_call_operand.vmem [shape: f32[10,2,32], index: 7, kind: output, shape index: {0}]
  %s8 = inlined_call_operand.vmem [shape: f32[10,2,32], index: 8, kind: output, shape index: {1}]
  %s9 = inlined_call_operand.vmem [shape: f32[2,64], index: 9, kind: output, shape index: {2}]
  %10 = xla_tuple %s7, %s8, %s9
  %s11 = sld [smem:[#allocation0]]
  $region61: #{nmt_forward.3} parent=0
    _
  %s13 = ssub.s32 1, %s11
  %s14 = scalar_select 0, %s13, %s11
  // Predicated region
  $region2: #{nmt_forward.3} parent=0 // pred_check
    _
  $region3: #{nmt_forward.3} parent=0 // pred_check_branch
    %16 = sbr.rel (0) target = $region5
  $region4: #{nmt_forward.3} parent=0 // pred_region
    _
  $region5: #{nmt_forward.3} parent=0 // pred_fallthru
    _
  // Predicated region
  $region6: #{nmt_forward.3} parent=0 // pred_check
    _
  $region7: #{nmt_forward.3} parent=0 // pred_check_branch
    %18 = sbr.rel (0) target = $region9
  $region8: #{nmt_forward.3} parent=0 // pred_region
    _
  $region9: #{nmt_forward.3} parent=0 // pred_fallthru
    _
  // Predicated region
  $region10: #{nmt_forward.3} parent=0 // pred_check
    _
  $region11: #{nmt_forward.3} parent=0 // pred_check_branch
    %20 = sbr.rel (0) target = $region13
  $region12: #{nmt_forward.3} parent=0 // pred_region
    _
  $region13: #{nmt_forward.3} parent=0 // pred_fallthru
    _
  // Predicated region
  $region14: #{nmt_forward.3} parent=0 // pred_check
    _
  $region15: #{nmt_forward.3} parent=0 // pred_check_branch
    %22 = sbr.rel (0) target = $region17
  $region16: #{nmt_forward.3} parent=0 // pred_region
    _
  $region17: #{nmt_forward.3} parent=0 // pred_fallthru
    _
  // Predicated region
  $region18: #{nmt_forward.3} parent=0 // pred_check
    _
  $region19: #{nmt_forward.3} parent=0 // pred_check_branch
    %24 = sbr.rel (0) target = $region21
  $region20: #{nmt_forward.3} parent=0 // pred_region
    _
  $region21: #{nmt_forward.3} parent=0 // pred_fallthru
    _
  // Predicated region
  $region22: #{nmt_forward.3} parent=0 // pred_check
    _
  $region23: #{nmt_forward.3} parent=0 // pred_check_branch
    %26 = sbr.rel (0) target = $region25
  $region24: #{nmt_forward.3} parent=0 // pred_region
    _
  $region25: #{nmt_forward.3} parent=0 // pred_fallthru
    _
  // Predicated region
  $region26: #{nmt_forward.3} parent=0 // pred_check
    _
  $region27: #{nmt_forward.3} parent=0 // pred_check_branch
    %28 = sbr.rel (0) target = $region29
  $region28: #{nmt_forward.3} parent=0 // pred_region
    _
  $region29: #{nmt_forward.3} parent=0 // pred_fallthru
    _
  %vm29 = vcmask 254976
  %30 = vst.msk [vmem:[#allocation2] sm:$0x3] %vm29, 0.0
  %31 = vst.msk [vmem:[#allocation3] sm:$0x3] %vm29, 0.0
  %32 = vst.msk [vmem:[#allocation4] sm:$0x3] %vm29, 0.0
  %33 = vst.msk [vmem:[#allocation5] sm:$0x3] %vm29, 0.0
  %v34 = vld [vmem:[%s3] sm:$0xff]
  %v35 = vld [vmem:[%s3 + $0x8] sm:$0xff]
  %v36 = vld [vmem:[%s3 + $0x10] sm:$0xff]
  %v37 = vld [vmem:[%s3 + $0x18] sm:$0xff]
  %v38 = vld [vmem:[%s4] sm:$0xff]
  %v39 = vld [vmem:[%s4 + $0x8] sm:$0xff]
  %v40 = vld [vmem:[%s4 + $0x10] sm:$0xff]
  %v41 = vld [vmem:[%s4 + $0x18] sm:$0xff]
  loop: start=0, step=1, limit=10
  $region30: #{nmt_forward.3} parent=0 // loop_pre_header
    _
  $region31: #{nmt_forward.3} parent=0 // loop_header
    %s43 = sphi 0, %s47
    %p44 = scmp.ge.s32.totalorder %s43, 10
  $region32: #{nmt_forward.3} parent=0 // loop_header_branch
    %46 = sbr.rel (%p44) target = $region36
  $region33: #{nmt_forward.3} parent=0 // loop_body
    %s48 = ssub.s32 9, %s43
    %s49 = smul.u32 %s43, 2
    %s50 = scalar_lea.vmem %s2, %s49
    %v51 = vld [vmem:[%s50] sm:$0x3]
    %v52 = vld [vmem:[#allocation2] sm:$0x3]
    %s53 = scalar_lea.vmem %s0, %s49
    %v54 = vld [vmem:[%s53] sm:$0x3]
    %vm55 = vcmask 261120
    %v57 = vsel %vm55, %v52, 0
    %59 = vmatprep.subr.mxu0 0.0
    %60 = vmatpush1.msra.mxu0 0.0
    %61 = vmatprep.subr.mxu0 0.0
    %62 = vmatpush1.msra.mxu0 0.0
    %63 = vmatprep.subr.mxu0 0.0
    %64 = vmatpush1.msra.mxu0 0.0
    %65 = vmatprep.subr.mxu0 0.0
    %66 = vmatpush1.msra.mxu0 0.0
    %67 = vmatprep.subr.mxu0 0.0
    %68 = vmatpush1.msra.mxu0 0.0
    %69 = vmatprep.subr.mxu0 0.0
    %70 = vmatpush1.msra.mxu0 0.0
    %71 = vmatprep.subr.mxu0 0.0
    %72 = vmatpush1.msra.mxu0 0.0
    %73 = vmatprep.subr.mxu0 0.0
    %74 = vmatpush1.msra.mxu0 0.0
    %75 = vmatprep.subr.mxu0 0.0
    %76 = vmatpush1.msra.mxu0 0.0
    %77 = vmatprep.subr.mxu0 0.0
    %78 = vmatpush1.msra.mxu0 0.0
    %79 = vmatprep.subr.mxu0 0.0
    %80 = vmatpush1.msra.mxu0 0.0
    %81 = vmatprep.subr.mxu0 0.0
    %82 = vmatpush1.msra.mxu0 0.0
    %83 = vmatprep.subr.mxu0 0.0
    %84 = vmatpush1.msra.mxu0 %v37
    %85 = vmatprep.subr.mxu0 0.0
    %86 = vmatpush1.msra.mxu0 %v36
    %87 = vmatprep.subr.mxu0 0.0
    %88 = vmatpush1.msra.mxu0 %v35
    %89 = vmatprep.subr.mxu0 0.0
    %90 = vmatpush1.msra.mxu0 %v34
    %91 = vmatprep.subr.mxu0 0.0
    %92 = vmatpush2.msra.mxu0 0.0
    %93 = vmatprep.subr.mxu0 0.0
    %94 = vmatpush2.msra.mxu0 0.0
    %95 = vmatprep.subr.mxu0 0.0
    %96 = vmatpush2.msra.mxu0 0.0
    %97 = vmatprep.subr.mxu0 0.0
    %98 = vmatpush2.msra.mxu0 0.0
    %99 = vmatprep.subr.mxu0 0.0
    %100 = vmatpush2.msra.mxu0 0.0
    %101 = vmatprep.subr.mxu0 0.0
    %102 = vmatpush2.msra.mxu0 0.0
    %103 = vmatprep.subr.mxu0 0.0
    %104 = vmatpush2.msra.mxu0 0.0
    %105 = vmatprep.subr.mxu0 0.0
    %106 = vmatpush2.msra.mxu0 0.0
    %107 = vmatprep.subr.mxu0 0.0
    %108 = vmatpush2.msra.mxu0 0.0
    %109 = vmatprep.subr.mxu0 0.0
    %110 = vmatpush2.msra.mxu0 0.0
    %111 = vmatprep.subr.mxu0 0.0
    %112 = vmatpush2.msra.mxu0 0.0
    %113 = vmatprep.subr.mxu0 0.0
    %114 = vmatpush2.msra.mxu0 0.0
    %115 = vmatprep.subr.mxu0 0.0
    %116 = vmatpush2.msra.mxu0 0.0
    %117 = vmatprep.subr.mxu0 0.0
    %118 = vmatpush2.msra.mxu0 0.0
    %119 = vmatprep.subr.mxu0 0.0
    %120 = vmatpush2.msra.mxu0 0.0
    %121 = vmatprep.subr.mxu0 0.0
    %122 = vmatpush2.msra.mxu0 0.0
    %123 = vmatprep.mubr.f32.mxu0 0.0
    %124 = vmatmul.mubr.f32.gmra.mxu0 %v57
    %v125 = vpop.f32.mrf.mxu0
    %v126 = vadd.f32 0.0, %v125
    %v127 = vpop.f32.mrf.mxu0
    %128 = vdwg.mxu0
    %v129 = vadd.f32 %v54, %v126
    %v130 = vld [vmem:[#allocation3] sm:$0x3]
    %v131 = vxor.u32 %v129, 2147483648
    %v132 = vmul.f32 %v131, 1.442695
    %v133 = vpow.pop %v132
    %v134 = vadd.f32 %v133, 1.0
    %v135 = vrcp.pop %v134
    %v136 = vmul.f32 1.0, %v135
    %v137 = vtanh.pop %v129
    %139 = vrot.lane.b32.xlu0 %v130, 32
    %v140 = vpop.permute.xlu0 %139
    %v142 = vmul.f32 %v136, %v140
    %144 = vrot.lane.b32.xlu0 %v137, 64
    %v145 = vpop.permute.xlu0 %144
    %v147 = vmul.f32 %v136, %v145
    %149 = vrot.lane.b32.xlu0 %v147, 32
    %v150 = vpop.permute.xlu0 %149
    %v152 = vadd.f32 %v142, %v150
    %v153 = vtanh.pop %v152
    %155 = vrot.lane.b32.xlu0 %v153, 64
    %v156 = vpop.permute.xlu0 %155
    %v158 = vmul.f32 %v136, %v156
    %vm159 = vcmp.gt.f32.partialorder %v51, 0.0
    %v160 = vsel %vm159, 1, 0
    %161 = vset.pattern.permute.xlu0 0
    %162 = vperm.xlu0 %161, %v160
    %v163 = vpop.permute.xlu0 %162
    %vm164 = vcmp.eq.s32.totalorder %v163, 1
    %165 = vrot.lane.b32.xlu0 %v52, 96
    %v166 = vpop.permute.xlu0 %165
    %v168 = vsel %vm164, %v158, %v166
    %v169 = vsel %vm164, %v152, %v140
    %171 = vrot.lane.b32.xlu0 %v168, 32
    %v172 = vpop.permute.xlu0 %171
    %174 = vst.msk [vmem:[#allocation2] sm:$0x3] %vm29, %v172
    %176 = vrot.lane.b32.xlu0 %v169, 96
    %v177 = vpop.permute.xlu0 %176
    %179 = vst.msk [vmem:[#allocation3] sm:$0x3] %vm29, %v177
    %s180 = scalar_lea.vmem %s7, %s49
    %181 = vst.msk [vmem:[%s180] sm:$0x3] %vm29, %v172
    %s182 = smul.u32 %s48, 2
    %s183 = scalar_lea.vmem %s2, %s182
    %v184 = vld [vmem:[%s183] sm:$0x3]
    %v185 = vld [vmem:[#allocation4] sm:$0x3]
    %s186 = scalar_lea.vmem %s1, %s182
    %v187 = vld [vmem:[%s186] sm:$0x3]
    %v189 = vsel %vm55, %v185, 0
    %191 = vmatprep.subr.mxu0 0.0
    %192 = vmatpush1.msra.mxu0 0.0
    %193 = vmatprep.subr.mxu0 0.0
    %194 = vmatpush1.msra.mxu0 0.0
    %195 = vmatprep.subr.mxu0 0.0
    %196 = vmatpush1.msra.mxu0 0.0
    %197 = vmatprep.subr.mxu0 0.0
    %198 = vmatpush1.msra.mxu0 0.0
    %199 = vmatprep.subr.mxu0 0.0
    %200 = vmatpush1.msra.mxu0 0.0
    %201 = vmatprep.subr.mxu0 0.0
    %202 = vmatpush1.msra.mxu0 0.0
    %203 = vmatprep.subr.mxu0 0.0
    %204 = vmatpush1.msra.mxu0 0.0
    %205 = vmatprep.subr.mxu0 0.0
    %206 = vmatpush1.msra.mxu0 0.0
    %207 = vmatprep.subr.mxu0 0.0
    %208 = vmatpush1.msra.mxu0 0.0
    %209 = vmatprep.subr.mxu0 0.0
    %210 = vmatpush1.msra.mxu0 0.0
    %211 = vmatprep.subr.mxu0 0.0
    %212 = vmatpush1.msra.mxu0 0.0
    %213 = vmatprep.subr.mxu0 0.0
    %214 = vmatpush1.msra.mxu0 0.0
    %215 = vmatprep.subr.mxu0 0.0
    %216 = vmatpush1.msra.mxu0 %v41
    %217 = vmatprep.subr.mxu0 0.0
    %218 = vmatpush1.msra.mxu0 %v40
    %219 = vmatprep.subr.mxu0 0.0
    %220 = vmatpush1.msra.mxu0 %v39
    %221 = vmatprep.subr.mxu0 0.0
    %222 = vmatpush1.msra.mxu0 %v38
    %223 = vmatprep.subr.mxu0 0.0
    %224 = vmatpush2.msra.mxu0 0.0
    %225 = vmatprep.subr.mxu0 0.0
    %226 = vmatpush2.msra.mxu0 0.0
    %227 = vmatprep.subr.mxu0 0.0
    %228 = vmatpush2.msra.mxu0 0.0
    %229 = vmatprep.subr.mxu0 0.0
    %230 = vmatpush2.msra.mxu0 0.0
    %231 = vmatprep.subr.mxu0 0.0
    %232 = vmatpush2.msra.mxu0 0.0
    %233 = vmatprep.subr.mxu0 0.0
    %234 = vmatpush2.msra.mxu0 0.0
    %235 = vmatprep.subr.mxu0 0.0
    %236 = vmatpush2.msra.mxu0 0.0
    %237 = vmatprep.subr.mxu0 0.0
    %238 = vmatpush2.msra.mxu0 0.0
    %239 = vmatprep.subr.mxu0 0.0
    %240 = vmatpush2.msra.mxu0 0.0
    %241 = vmatprep.subr.mxu0 0.0
    %242 = vmatpush2.msra.mxu0 0.0
    %243 = vmatprep.subr.mxu0 0.0
    %244 = vmatpush2.msra.mxu0 0.0
    %245 = vmatprep.subr.mxu0 0.0
    %246 = vmatpush2.msra.mxu0 0.0
    %247 = vmatprep.subr.mxu0 0.0
    %248 = vmatpush2.msra.mxu0 0.0
    %249 = vmatprep.subr.mxu0 0.0
    %250 = vmatpush2.msra.mxu0 0.0
    %251 = vmatprep.subr.mxu0 0.0
    %252 = vmatpush2.msra.mxu0 0.0
    %253 = vmatprep.subr.mxu0 0.0
    %254 = vmatpush2.msra.mxu0 0.0
    %255 = vmatprep.mubr.f32.mxu0 0.0
    %256 = vmatmul.mubr.f32.gmra.mxu0 %v189
    %v257 = vpop.f32.mrf.mxu0
    %v258 = vadd.f32 0.0, %v257
    %v259 = vpop.f32.mrf.mxu0
    %260 = vdwg.mxu0
    %v261 = vadd.f32 %v187, %v258
    %v262 = vld [vmem:[#allocation5] sm:$0x3]
    %v263 = vxor.u32 %v261, 2147483648
    %v264 = vmul.f32 %v263, 1.442695
    %v265 = vpow.pop %v264
    %v266 = vadd.f32 %v265, 1.0
    %v267 = vrcp.pop %v266
    %v268 = vmul.f32 1.0, %v267
    %v269 = vtanh.pop %v261
    %271 = vrot.lane.b32.xlu0 %v262, 32
    %v272 = vpop.permute.xlu0 %271
    %v274 = vmul.f32 %v268, %v272
    %276 = vrot.lane.b32.xlu0 %v269, 64
    %v277 = vpop.permute.xlu0 %276
    %v279 = vmul.f32 %v268, %v277
    %281 = vrot.lane.b32.xlu0 %v279, 32
    %v282 = vpop.permute.xlu0 %281
    %v284 = vadd.f32 %v274, %v282
    %v285 = vtanh.pop %v284
    %287 = vrot.lane.b32.xlu0 %v285, 64
    %v288 = vpop.permute.xlu0 %287
    %v290 = vmul.f32 %v268, %v288
    %vm291 = vcmp.gt.f32.partialorder %v184, 0.0
    %v292 = vsel %vm291, 1, 0
    %293 = vset.pattern.permute.xlu0 0
    %294 = vperm.xlu0 %293, %v292
    %v295 = vpop.permute.xlu0 %294
    %vm296 = vcmp.eq.s32.totalorder %v295, 1
    %297 = vrot.lane.b32.xlu0 %v185, 96
    %v298 = vpop.permute.xlu0 %297
    %v300 = vsel %vm296, %v290, %v298
    %v301 = vsel %vm296, %v284, %v272
    %303 = vrot.lane.b32.xlu0 %v300, 32
    %v304 = vpop.permute.xlu0 %303
    %306 = vst.msk [vmem:[#allocation4] sm:$0x3] %vm29, %v304
    %308 = vrot.lane.b32.xlu0 %v301, 96
    %v309 = vpop.permute.xlu0 %308
    %311 = vst.msk [vmem:[#allocation5] sm:$0x3] %vm29, %v309
    %s312 = scalar_lea.vmem %s8, %s182
    %313 = vst.msk [vmem:[%s312] sm:$0x3] %vm29, %v304
  $region34: #{nmt_forward.3} parent=0 // loop_footer
    %s47 = sadd.s32 1, %s43
  $region35: #{nmt_forward.3} parent=0 // loop_footer_branch
    %42 = sbr.rel target = $region31
  $region36: #{nmt_forward.3} parent=0 // loop_exit
    _
  %v314 = vld [vmem:[%s2] sm:$0x3]
  %v315 = vld [vmem:[%s2 + $0x2] sm:$0x3]
  %v316 = vld [vmem:[%s2 + $0x4] sm:$0x3]
  %v317 = vld [vmem:[%s2 + $0x6] sm:$0x3]
  %v318 = vld [vmem:[%s2 + $0x8] sm:$0x3]
  %v319 = vld [vmem:[%s2 + $0xa] sm:$0x3]
  %v320 = vld [vmem:[%s2 + $0xc] sm:$0x3]
  %v321 = vld [vmem:[%s2 + $0xe] sm:$0x3]
  %v322 = vld [vmem:[%s2 + $0x10] sm:$0x3]
  %v323 = vld [vmem:[%s2 + $0x12] sm:$0x3]
  %v324 = vld [vmem:[%s7] sm:$0x3]
  %v325 = vld [vmem:[%s7 + $0x2] sm:$0x3]
  %v326 = vld [vmem:[%s7 + $0x4] sm:$0x3]
  %v327 = vld [vmem:[%s7 + $0x6] sm:$0x3]
  %v328 = vld [vmem:[%s7 + $0x8] sm:$0x3]
  %v329 = vld [vmem:[%s7 + $0xa] sm:$0x3]
  %v330 = vld [vmem:[%s7 + $0xc] sm:$0x3]
  %v331 = vld [vmem:[%s7 + $0xe] sm:$0x3]
  %v332 = vld [vmem:[%s7 + $0x10] sm:$0x3]
  %v333 = vld [vmem:[%s7 + $0x12] sm:$0x3]
  %v334 = vld [vmem:[%s8] sm:$0x3]
  %v335 = vld [vmem:[%s8 + $0x2] sm:$0x3]
  %v336 = vld [vmem:[%s8 + $0x4] sm:$0x3]
  %v337 = vld [vmem:[%s8 + $0x6] sm:$0x3]
  %v338 = vld [vmem:[%s8 + $0x8] sm:$0x3]
  %v339 = vld [vmem:[%s8 + $0xa] sm:$0x3]
  %v340 = vld [vmem:[%s8 + $0xc] sm:$0x3]
  %v341 = vld [vmem:[%s8 + $0xe] sm:$0x3]
  %v342 = vld [vmem:[%s8 + $0x10] sm:$0x3]
  %v343 = vld [vmem:[%s8 + $0x12] sm:$0x3]
  %vm344 = vcmask 1024
  %v345 = vsel %vm344, %v314, 0.0
  %v346 = vsel %vm344, %v315, 0.0
  %v347 = vadd.f32 %v345, %v346
  %v348 = vsel %vm344, %v316, 0.0
  %v349 = vadd.f32 %v347, %v348
  %v350 = vsel %vm344, %v317, 0.0
  %v351 = vadd.f32 %v349, %v350
  %v352 = vsel %vm344, %v318, 0.0
  %v353 = vadd.f32 %v351, %v352
  %v354 = vsel %vm344, %v319, 0.0
  %v355 = vadd.f32 %v353, %v354
  %v356 = vsel %vm344, %v320, 0.0
  %v357 = vadd.f32 %v355, %v356
  %v358 = vsel %vm344, %v321, 0.0
  %v359 = vadd.f32 %v357, %v358
  %v360 = vsel %vm344, %v322, 0.0
  %v361 = vadd.f32 %v359, %v360
  %v362 = vsel %vm344, %v323, 0.0
  %v363 = vadd.f32 %v361, %v362
  %v364 = vmax.f32 %v363, 1.0
  %v365 = vrcp.pop %v364
  %v366 = vmul.f32 1.0, %v365
  %368 = vset.pattern.permute.xlu0 0
  %369 = vperm.xlu0 %368, %v314
  %v370 = vpop.permute.xlu0 %369
  %373 = vset.pattern.permute.xlu0 0
  %374 = vperm.xlu0 %373, %v315
  %v375 = vpop.permute.xlu0 %374
  %378 = vset.pattern.permute.xlu0 0
  %379 = vperm.xlu0 %378, %v316
  %v380 = vpop.permute.xlu0 %379
  %383 = vset.pattern.permute.xlu0 0
  %384 = vperm.xlu0 %383, %v317
  %v385 = vpop.permute.xlu0 %384
  %388 = vset.pattern.permute.xlu0 0
  %389 = vperm.xlu0 %388, %v318
  %v390 = vpop.permute.xlu0 %389
  %393 = vset.pattern.permute.xlu0 0
  %394 = vperm.xlu0 %393, %v319
  %v395 = vpop.permute.xlu0 %394
  %398 = vset.pattern.permute.xlu0 0
  %399 = vperm.xlu0 %398, %v320
  %v400 = vpop.permute.xlu0 %399
  %403 = vset.pattern.permute.xlu0 0
  %404 = vperm.xlu0 %403, %v321
  %v405 = vpop.permute.xlu0 %404
  %408 = vset.pattern.permute.xlu0 0
  %409 = vperm.xlu0 %408, %v322
  %v410 = vpop.permute.xlu0 %409
  %413 = vset.pattern.permute.xlu0 0
  %414 = vperm.xlu0 %413, %v323
  %v415 = vpop.permute.xlu0 %414
  %v417 = vmul.f32 %v324, %v370
  %v418 = vmul.f32 %v325, %v375
  %v419 = vmul.f32 %v326, %v380
  %v420 = vmul.f32 %v327, %v385
  %v421 = vmul.f32 %v328, %v390
  %v422 = vmul.f32 %v329, %v395
  %v423 = vmul.f32 %v330, %v400
  %v424 = vmul.f32 %v331, %v405
  %v425 = vmul.f32 %v332, %v410
  %v426 = vmul.f32 %v333, %v415
  %v427 = vsel %vm29, %v417, 0.0
  %v428 = vsel %vm29, %v418, 0.0
  %v429 = vadd.f32 %v427, %v428
  %v430 = vsel %vm29, %v419, 0.0
  %v431 = vadd.f32 %v429, %v430
  %v432 = vsel %vm29, %v420, 0.0
  %v433 = vadd.f32 %v431, %v432
  %v434 = vsel %vm29, %v421, 0.0
  %v435 = vadd.f32 %v433, %v434
  %v436 = vsel %vm29, %v422, 0.0
  %v437 = vadd.f32 %v435, %v436
  %v438 = vsel %vm29, %v423, 0.0
  %v439 = vadd.f32 %v437, %v438
  %v440 = vsel %vm29, %v424, 0.0
  %v441 = vadd.f32 %v439, %v440
  %v442 = vsel %vm29, %v425, 0.0
  %v443 = vadd.f32 %v441, %v442
  %v444 = vsel %vm29, %v426, 0.0
  %v445 = vadd.f32 %v443, %v444
  %447 = vset.pattern.permute.xlu0 0
  %448 = vperm.xlu0 %447, %v366
  %v449 = vpop.permute.xlu0 %448
  %v451 = vmul.f32 %v445, %v449
  %v452 = vmul.f32 %v334, %v370
  %v453 = vmul.f32 %v335, %v375
  %v454 = vmul.f32 %v336, %v380
  %v455 = vmul.f32 %v337, %v385
  %v456 = vmul.f32 %v338, %v390
  %v457 = vmul.f32 %v339, %v395
  %v458 = vmul.f32 %v340, %v400
  %v459 = vmul.f32 %v341, %v405
  %v460 = vmul.f32 %v342, %v410
  %v461 = vmul.f32 %v343, %v415
  %v462 = vsel %vm29, %v452, 0.0
  %v463 = vsel %vm29, %v453, 0.0
  %v464 = vadd.f32 %v462, %v463
  %v465 = vsel %vm29, %v454, 0.0
  %v466 = vadd.f32 %v464, %v465
  %v467 = vsel %vm29, %v455, 0.0
  %v468 = vadd.f32 %v466, %v467
  %v469 = vsel %vm29, %v456, 0.0
  %v470 = vadd.f32 %v468, %v469
  %v471 = vsel %vm29, %v457, 0.0
  %v472 = vadd.f32 %v470, %v471
  %v473 = vsel %vm29, %v458, 0.0
  %v474 = vadd.f32 %v472, %v473
  %v475 = vsel %vm29, %v459, 0.0
  %v476 = vadd.f32 %v474, %v475
  %v477 = vsel %vm29, %v460, 0.0
  %v478 = vadd.f32 %v476, %v477
  %v479 = vsel %vm29, %v461, 0.0
  %v480 = vadd.f32 %v478, %v479
  %v481 = vmul.f32 %v480, %v449
  %v482 = vld [vmem:[%s5] sm:$0xff]
  %v483 = vld [vmem:[%s5 + $0x8] sm:$0xff]
  %v484 = vld [vmem:[%s5 + $0x10] sm:$0xff]
  %v485 = vld [vmem:[%s5 + $0x18] sm:$0xff]
  %v486 = vld [vmem:[%s5 + $0x20] sm:$0xff]
  %v487 = vld [vmem:[%s5 + $0x28] sm:$0xff]
  %v488 = vld [vmem:[%s5 + $0x30] sm:$0xff]
  %v489 = vld [vmem:[%s5 + $0x38] sm:$0xff]
  %vm490 = vcmask 261120
  %v492 = vsel %vm490, %v481, 0
  %494 = vmatprep.subr.mxu0 0.0
  %495 = vmatpush1.msra.mxu0 0.0
  %496 = vmatprep.subr.mxu0 0.0
  %497 = vmatpush1.msra.mxu0 0.0
  %498 = vmatprep.subr.mxu0 0.0
  %499 = vmatpush1.msra.mxu0 0.0
  %500 = vmatprep.subr.mxu0 0.0
  %501 = vmatpush1.msra.mxu0 0.0
  %502 = vmatprep.subr.mxu0 0.0
  %503 = vmatpush1.msra.mxu0 0.0
  %504 = vmatprep.subr.mxu0 0.0
  %505 = vmatpush1.msra.mxu0 0.0
  %506 = vmatprep.subr.mxu0 0.0
  %507 = vmatpush1.msra.mxu0 0.0
  %508 = vmatprep.subr.mxu0 0.0
  %509 = vmatpush1.msra.mxu0 0.0
  %510 = vmatprep.subr.mxu0 0.0
  %511 = vmatpush1.msra.mxu0 0.0
  %512 = vmatprep.subr.mxu0 0.0
  %513 = vmatpush1.msra.mxu0 0.0
  %514 = vmatprep.subr.mxu0 0.0
  %515 = vmatpush1.msra.mxu0 0.0
  %516 = vmatprep.subr.mxu0 0.0
  %517 = vmatpush1.msra.mxu0 0.0
  %518 = vmatprep.subr.mxu0 0.0
  %519 = vmatpush1.msra.mxu0 %v489
  %520 = vmatprep.subr.mxu0 0.0
  %521 = vmatpush1.msra.mxu0 %v488
  %522 = vmatprep.subr.mxu0 0.0
  %523 = vmatpush1.msra.mxu0 %v487
  %524 = vmatprep.subr.mxu0 0.0
  %525 = vmatpush1.msra.mxu0 %v486
  %526 = vmatprep.subr.mxu0 0.0
  %527 = vmatpush2.msra.mxu0 0.0
  %528 = vmatprep.subr.mxu0 0.0
  %529 = vmatpush2.msra.mxu0 0.0
  %530 = vmatprep.subr.mxu0 0.0
  %531 = vmatpush2.msra.mxu0 0.0
  %532 = vmatprep.subr.mxu0 0.0
  %533 = vmatpush2.msra.mxu0 0.0
  %534 = vmatprep.subr.mxu0 0.0
  %535 = vmatpush2.msra.mxu0 0.0
  %536 = vmatprep.subr.mxu0 0.0
  %537 = vmatpush2.msra.mxu0 0.0
  %538 = vmatprep.subr.mxu0 0.0
  %539 = vmatpush2.msra.mxu0 0.0
  %540 = vmatprep.subr.mxu0 0.0
  %541 = vmatpush2.msra.mxu0 0.0
  %542 = vmatprep.subr.mxu0 0.0
  %543 = vmatpush2.msra.mxu0 0.0
  %544 = vmatprep.subr.mxu0 0.0
  %545 = vmatpush2.msra.mxu0 0.0
  %546 = vmatprep.subr.mxu0 0.0
  %547 = vmatpush2.msra.mxu0 0.0
  %548 = vmatprep.subr.mxu0 0.0
  %549 = vmatpush2.msra.mxu0 0.0
  %550 = vmatprep.subr.mxu0 0.0
  %551 = vmatpush2.msra.mxu0 0.0
  %552 = vmatprep.subr.mxu0 0.0
  %553 = vmatpush2.msra.mxu0 0.0
  %554 = vmatprep.subr.mxu0 0.0
  %555 = vmatpush2.msra.mxu0 0.0
  %556 = vmatprep.subr.mxu0 0.0
  %557 = vmatpush2.msra.mxu0 0.0
  %558 = vmatprep.mubr.f32.mxu0 0.0
  %559 = vmatmul.mubr.f32.gmra.mxu0 %v492
  %v560 = vpop.f32.mrf.mxu0
  %v561 = vadd.f32 0.0, %v560
  %v562 = vpop.f32.mrf.mxu0
  %563 = vdwg.mxu0
  %v565 = vsel %vm490, %v451, 0
  %567 = vmatprep.subr.mxu0 0.0
  %568 = vmatpush1.msra.mxu0 0.0
  %569 = vmatprep.subr.mxu0 0.0
  %570 = vmatpush1.msra.mxu0 0.0
  %571 = vmatprep.subr.mxu0 0.0
  %572 = vmatpush1.msra.mxu0 0.0
  %573 = vmatprep.subr.mxu0 0.0
  %574 = vmatpush1.msra.mxu0 0.0
  %575 = vmatprep.subr.mxu0 0.0
  %576 = vmatpush1.msra.mxu0 0.0
  %577 = vmatprep.subr.mxu0 0.0
  %578 = vmatpush1.msra.mxu0 0.0
  %579 = vmatprep.subr.mxu0 0.0
  %580 = vmatpush1.msra.mxu0 0.0
  %581 = vmatprep.subr.mxu0 0.0
  %582 = vmatpush1.msra.mxu0 0.0
  %583 = vmatprep.subr.mxu0 0.0
  %584 = vmatpush1.msra.mxu0 0.0
  %585 = vmatprep.subr.mxu0 0.0
  %586 = vmatpush1.msra.mxu0 0.0
  %587 = vmatprep.subr.mxu0 0.0
  %588 = vmatpush1.msra.mxu0 0.0
  %589 = vmatprep.subr.mxu0 0.0
  %590 = vmatpush1.msra.mxu0 0.0
  %591 = vmatprep.subr.mxu0 0.0
  %592 = vmatpush1.msra.mxu0 %v485
  %593 = vmatprep.subr.mxu0 0.0
  %594 = vmatpush1.msra.mxu0 %v484
  %595 = vmatprep.subr.mxu0 0.0
  %596 = vmatpush1.msra.mxu0 %v483
  %597 = vmatprep.subr.mxu0 0.0
  %598 = vmatpush1.msra.mxu0 %v482
  %599 = vmatprep.subr.mxu0 0.0
  %600 = vmatpush2.msra.mxu0 0.0
  %601 = vmatprep.subr.mxu0 0.0
  %602 = vmatpush2.msra.mxu0 0.0
  %603 = vmatprep.subr.mxu0 0.0
  %604 = vmatpush2.msra.mxu0 0.0
  %605 = vmatprep.subr.mxu0 0.0
  %606 = vmatpush2.msra.mxu0 0.0
  %607 = vmatprep.subr.mxu0 0.0
  %608 = vmatpush2.msra.mxu0 0.0
  %609 = vmatprep.subr.mxu0 0.0
  %610 = vmatpush2.msra.mxu0 0.0
  %611 = vmatprep.subr.mxu0 0.0
  %612 = vmatpush2.msra.mxu0 0.0
  %613 = vmatprep.subr.mxu0 0.0
  %614 = vmatpush2.msra.mxu0 0.0
  %615 = vmatprep.subr.mxu0 0.0
  %616 = vmatpush2.msra.mxu0 0.0
  %617 = vmatprep.subr.mxu0 0.0
  %618 = vmatpush2.msra.mxu0 0.0
  %619 = vmatprep.subr.mxu0 0.0
  %620 = vmatpush2.msra.mxu0 0.0
  %621 = vmatprep.subr.mxu0 0.0
  %622 = vmatpush2.msra.mxu0 0.0
  %623 = vmatprep.subr.mxu0 0.0
  %624 = vmatpush2.msra.mxu0 0.0
  %625 = vmatprep.subr.mxu0 0.0
  %626 = vmatpush2.msra.mxu0 0.0
  %627 = vmatprep.subr.mxu0 0.0
  %628 = vmatpush2.msra.mxu0 0.0
  %629 = vmatprep.subr.mxu0 0.0
  %630 = vmatpush2.msra.mxu0 0.0
  %631 = vmatprep.mubr.f32.mxu0 0.0
  %632 = vmatmul.mubr.f32.gmra.mxu0 %v565
  %v633 = vpop.f32.mrf.mxu0
  %v634 = vadd.f32 %v561, %v633
  %v635 = vpop.f32.mrf.mxu0
  %636 = vdwg.mxu0
  %v637 = vld [vmem:[%s6] sm:$0x1]
  %v639 = vlaneseq
  %v640 = vshrl.u32 %v639, 7
  %v641 = vsub.s32 0, %v640
  %v642 = vrot.slane %v637, %v641
  %v644 = vadd.f32 %v634, %v642
  %v645 = vtanh.pop %v644
  %vm646 = vcmask 517120
  %647 = vst.msk [vmem:[%s9] sm:$0x3] %vm646, %v645
  // Predicated region
  $region37: #{nmt_forward.3} parent=0 // pred_check
    _
  $region38: #{nmt_forward.3} parent=0 // pred_check_branch
    %649 = sbr.rel (0) target = $region40
  $region39: #{nmt_forward.3} parent=0 // pred_region
    _
  $region40: #{nmt_forward.3} parent=0 // pred_fallthru
    _
  // Predicated region
  $region41: #{nmt_forward.3} parent=0 // pred_check
    _
  $region42: #{nmt_forward.3} parent=0 // pred_check_branch
    %651 = sbr.rel (0) target = $region44
  $region43: #{nmt_forward.3} parent=0 // pred_region
    _
  $region44: #{nmt_forward.3} parent=0 // pred_fallthru
    _
  // Predicated region
  $region45: #{nmt_forward.3} parent=0 // pred_check
    _
  $region46: #{nmt_forward.3} parent=0 // pred_check_branch
    %653 = sbr.rel (0) target = $region48
  $region47: #{nmt_forward.3} parent=0 // pred_region
    _
  $region48: #{nmt_forward.3} parent=0 // pred_fallthru
    _
  // Predicated region
  $region49: #{nmt_forward.3} parent=0 // pred_check
    _
  $region50: #{nmt_forward.3} parent=0 // pred_check_branch
    %655 = sbr.rel (0) target = $region52
  $region51: #{nmt_forward.3} parent=0 // pred_region
    _
  $region52: #{nmt_forward.3} parent=0 // pred_fallthru
    _
  // Predicated region
  $region53: #{nmt_forward.3} parent=0 // pred_check
    _
  $region54: #{nmt_forward.3} parent=0 // pred_check_branch
    %657 = sbr.rel (0) target = $region56
  $region55: #{nmt_forward.3} parent=0 // pred_region
    _
  $region56: #{nmt_forward.3} parent=0 // pred_fallthru
    _
  // Predicated region
  $region57: #{nmt_forward.3} parent=0 // pred_check
    _
  $region58: #{nmt_forward.3} parent=0 // pred_check_branch
    %659 = sbr.rel (0) target = $region60
  $region59: #{nmt_forward.3} parent=0 // pred_region
    _
  $region60: #{nmt_forward.3} parent=0 // pred_fallthru
    _

// kernel: nmt_forward.5
$region0: #{nmt_forward.5}
  #allocation0 [shape = 'u32[]', space=smem, size = 0x4, offset = 0x4, fixed_abs, tag = 'smem constant byte address 0x4 - core index']
  #allocation1 [shape = 'u32[144,128]{1,0:T(1,128)}', space=vmem, size = 0x12000, scoped, tag = 'internal scratch']
  %s0 = inlined_call_operand.vmem [shape: f32[2,8,32], index: 0, kind: input, shape index: {}]
  %s1 = inlined_call_operand.vmem [shape: f32[2,10,32], index: 1, kind: input, shape index: {}]
  %s2 = inlined_call_operand.vmem [shape: f32[2,10,32], index: 2, kind: input, shape index: {}]
  %s3 = inlined_call_operand.vmem [shape: f32[2,1,10], index: 3, kind: input, shape index: {}]
  %s4 = inlined_call_operand.vmem [shape: s32[2,8,1], index: 4, kind: input, shape index: {}]
  %s5 = inlined_call_operand.vmem [shape: f32[32,64], index: 5, kind: input, shape index: {}]
  %s6 = inlined_call_operand.vmem [shape: f32[32,32], index: 6, kind: input, shape index: {}]
  %s7 = inlined_call_operand.vmem [shape: f32[64,32], index: 7, kind: input, shape index: {}]
  %s8 = inlined_call_operand.vmem [shape: f32[1,32], index: 8, kind: input, shape index: {}]
  %s9 = inlined_call_operand.vmem [shape: f32[32,64], index: 9, kind: input, shape index: {}]
  %s10 = inlined_call_operand.vmem [shape: f32[2,1,1], index: 10, kind: output, shape index: {}]
  %s11 = sld [smem:[#allocation0]]
  $region73: #{nmt_forward.5} parent=0
    _
  %s13 = ssub.s32 1, %s11
  %s14 = scalar_select 0, %s13, %s11
  loop: start=0, step=1, limit=4
  $region2: #{nmt_forward.5} parent=0 // loop_pre_header
    _
  $region3: #{nmt_forward.5} parent=0 // loop_header
    %s16 = sphi 0, %s20
    %p17 = scmp.ge.s32.totalorder %s16, 4
    %s26 = sphi 0, %s28
    %s29 = sphi 0, %s26
    %s30 = sphi 0, %s29
    %s46 = sphi 0, %s30
    %s52 = sphi 0, %s54
    %s55 = sphi 0, %s52
    %s56 = sphi 0, %s55
    %s72 = sphi 0, %s56
    %s78 = sphi 0, %s80
    %s81 = sphi 0, %s78
    %s82 = sphi 0, %s81
    %s98 = sphi 0, %s82
    %s104 = sphi 0, %s106
    %s107 = sphi 0, %s104
    %s108 = sphi 0, %s107
    %s124 = sphi 0, %s108
    %s130 = sphi 0, %s132
    %s133 = sphi 0, %s130
    %s134 = sphi 0, %s133
    %s150 = sphi 0, %s134
    %s154 = sphi 0, %s154
    %s156 = sphi 0, %s154
    %s157 = sphi 0, %s156
    %s171 = sphi 0, %s157
    %s175 = sphi 0, %s175
    %s177 = sphi 0, %s175
    %s178 = sphi 0, %s177
    %s192 = sphi 0, %s178
    %s196 = sphi 0, %s196
    %s198 = sphi 0, %s196
    %s199 = sphi 0, %s198
    %s213 = sphi 0, %s199
    %s217 = sphi 0, %s217
    %s219 = sphi 0, %s217
    %s220 = sphi 0, %s219
    %s234 = sphi 0, %s220
    %s238 = sphi 0, %s238
    %s240 = sphi 0, %s238
    %s241 = sphi 0, %s240
    %s255 = sphi 0, %s241
    %s261 = sphi 0, %s263
    %s264 = sphi 0, %s261
    %s265 = sphi 0, %s264
    %s281 = sphi 0, %s265
  $region4: #{nmt_forward.5} parent=0 // loop_header_branch
    %19 = sbr.rel (%p17) target = $region8
  $region5: #{nmt_forward.5} parent=0 // loop_body
    %s21 = ssub.s32 %s16, 1
    %s22 = ssub.s32 %s16, 2
    %s23 = sadd.s32 %s16, 1
    %s24 = ssub.s32 %s16, %s23
    %p25 = scmp.eq.s32.totalorder %s24, 0
    %s27 = sadd.s32 %s26, 1
    %s28 = scalar_select %p25, %s26, %s27
    %p31 = pneg %p25
    %p32 = scmp.eq.s32.totalorder %s16, 1
    %p33 = por %p31, %p32
    %p34 = scmp.ne.s32.totalorder %s26, %s29
    %p35 = scmp.eq.s32.totalorder %s16, 0
    %p36 = por %p34, %p35
    %p37 = scmp.ne.s32.totalorder %s26, %s29
    %p38 = scmp.eq.s32.totalorder %s21, 1
    %p39 = por %p37, %p38
    %p40 = scmp.ne.s32.totalorder %s29, %s30
    %p41 = scmp.eq.s32.totalorder %s21, 0
    %p42 = por %p40, %p41
    %p43 = scmp.ne.s32.totalorder %s29, %s30
    %p44 = scmp.eq.s32.totalorder %s22, 1
    %p45 = por %p43, %p44
    %p47 = scmp.ne.s32.totalorder %s30, %s46
    %p48 = scmp.eq.s32.totalorder %s22, 0
    %p49 = por %p47, %p48
    %s50 = ssub.s32 %s16, %s23
    %p51 = scmp.eq.s32.totalorder %s50, 0
    %s53 = sadd.s32 %s52, 1
    %s54 = scalar_select %p51, %s52, %s53
    %p57 = pneg %p51
    %p58 = scmp.eq.s32.totalorder %s16, 1
    %p59 = por %p57, %p58
    %p60 = scmp.ne.s32.totalorder %s52, %s55
    %p61 = scmp.eq.s32.totalorder %s16, 0
    %p62 = por %p60, %p61
    %p63 = scmp.ne.s32.totalorder %s52, %s55
    %p64 = scmp.eq.s32.totalorder %s21, 1
    %p65 = por %p63, %p64
    %p66 = scmp.ne.s32.totalorder %s55, %s56
    %p67 = scmp.eq.s32.totalorder %s21, 0
    %p68 = por %p66, %p67
    %p69 = scmp.ne.s32.totalorder %s55, %s56
    %p70 = scmp.eq.s32.totalorder %s22, 1
    %p71 = por %p69, %p70
    %p73 = scmp.ne.s32.totalorder %s56, %s72
    %p74 = scmp.eq.s32.totalorder %s22, 0
    %p75 = por %p73, %p74
    %s76 = ssub.s32 %s16, %s23
    %p77 = scmp.eq.s32.totalorder %s76, 0
    %s79 = sadd.s32 %s78, 1
    %s80 = scalar_select %p77, %s78, %s79
    %p83 = pneg %p77
    %p84 = scmp.eq.s32.totalorder %s16, 1
    %p85 = por %p83, %p84
    %p86 = scmp.ne.s32.totalorder %s78, %s81
    %p87 = scmp.eq.s32.totalorder %s16, 0
    %p88 = por %p86, %p87
    %p89 = scmp.ne.s32.totalorder %s78, %s81
    %p90 = scmp.eq.s32.totalorder %s21, 1
    %p91 = por %p89, %p90
    %p92 = scmp.ne.s32.totalorder %s81, %s82
    %p93 = scmp.eq.s32.totalorder %s21, 0
    %p94 = por %p92, %p93
    %p95 = scmp.ne.s32.totalorder %s81, %s82
    %p96 = scmp.eq.s32.totalorder %s22, 1
    %p97 = por %p95, %p96
    %p99 = scmp.ne.s32.totalorder %s82, %s98
    %p100 = scmp.eq.s32.totalorder %s22, 0
    %p101 = por %p99, %p100
    %s102 = ssub.s32 %s16, %s23
    %p103 = scmp.eq.s32.totalorder %s102, 0
    %s105 = sadd.s32 %s104, 1
    %s106 = scalar_select %p103, %s104, %s105
    %p109 = pneg %p103
    %p110 = scmp.eq.s32.totalorder %s16, 1
    %p111 = por %p109, %p110
    %p112 = scmp.ne.s32.totalorder %s104, %s107
    %p113 = scmp.eq.s32.totalorder %s16, 0
    %p114 = por %p112, %p113
    %p115 = scmp.ne.s32.totalorder %s104, %s107
    %p116 = scmp.eq.s32.totalorder %s21, 1
    %p117 = por %p115, %p116
    %p118 = scmp.ne.s32.totalorder %s107, %s108
    %p119 = scmp.eq.s32.totalorder %s21, 0
    %p120 = por %p118, %p119
    %p121 = scmp.ne.s32.totalorder %s107, %s108
    %p122 = scmp.eq.s32.totalorder %s22, 1
    %p123 = por %p121, %p122
    %p125 = scmp.ne.s32.totalorder %s108, %s124
    %p126 = scmp.eq.s32.totalorder %s22, 0
    %p127 = por %p125, %p126
    %s128 = ssub.s32 %s16, %s23
    %p129 = scmp.eq.s32.totalorder %s128, 0
    %s131 = sadd.s32 %s130, 1
    %s132 = scalar_select %p129, %s130, %s131
    %p135 = pneg %p129
    %p136 = scmp.eq.s32.totalorder %s16, 1
    %p137 = por %p135, %p136
    %p138 = scmp.ne.s32.totalorder %s130, %s133
    %p139 = scmp.eq.s32.totalorder %s16, 0
    %p140 = por %p138, %p139
    %p141 = scmp.ne.s32.totalorder %s130, %s133
    %p142 = scmp.eq.s32.totalorder %s21, 1
    %p143 = por %p141, %p142
    %p144 = scmp.ne.s32.totalorder %s133, %s134
    %p145 = scmp.eq.s32.totalorder %s21, 0
    %p146 = por %p144, %p145
    %p147 = scmp.ne.s32.totalorder %s133, %s134
    %p148 = scmp.eq.s32.totalorder %s22, 1
    %p149 = por %p147, %p148
    %p151 = scmp.ne.s32.totalorder %s134, %s150
    %p152 = scmp.eq.s32.totalorder %s22, 0
    %p153 = por %p151, %p152
    %s155 = sadd.s32 %s154, 1
    %p158 = scmp.eq.s32.totalorder %s16, 1
    %p159 = scmp.ne.s32.totalorder %s154, %s156
    %p160 = scmp.eq.s32.totalorder %s16, 0
    %p161 = por %p159, %p160
    %p162 = scmp.ne.s32.totalorder %s154, %s156
    %p163 = scmp.eq.s32.totalorder %s21, 1
    %p164 = por %p162, %p163
    %p165 = scmp.ne.s32.totalorder %s156, %s157
    %p166 = scmp.eq.s32.totalorder %s21, 0
    %p167 = por %p165, %p166
    %p168 = scmp.ne.s32.totalorder %s156, %s157
    %p169 = scmp.eq.s32.totalorder %s22, 1
    %p170 = por %p168, %p169
    %p172 = scmp.ne.s32.totalorder %s157, %s171
    %p173 = scmp.eq.s32.totalorder %s22, 0
    %p174 = por %p172, %p173
    %s176 = sadd.s32 %s175, 1
    %p179 = scmp.eq.s32.totalorder %s16, 1
    %p180 = scmp.ne.s32.totalorder %s175, %s177
    %p181 = scmp.eq.s32.totalorder %s16, 0
    %p182 = por %p180, %p181
    %p183 = scmp.ne.s32.totalorder %s175, %s177
    %p184 = scmp.eq.s32.totalorder %s21, 1
    %p185 = por %p183, %p184
    %p186 = scmp.ne.s32.totalorder %s177, %s178
    %p187 = scmp.eq.s32.totalorder %s21, 0
    %p188 = por %p186, %p187
    %p189 = scmp.ne.s32.totalorder %s177, %s178
    %p190 = scmp.eq.s32.totalorder %s22, 1
    %p191 = por %p189, %p190
    %p193 = scmp.ne.s32.totalorder %s178, %s192
    %p194 = scmp.eq.s32.totalorder %s22, 0
    %p195 = por %p193, %p194
    %s197 = sadd.s32 %s196, 1
    %p200 = scmp.eq.s32.totalorder %s16, 1
    %p201 = scmp.ne.s32.totalorder %s196, %s198
    %p202 = scmp.eq.s32.totalorder %s16, 0
    %p203 = por %p201, %p202
    %p204 = scmp.ne.s32.totalorder %s196, %s198
    %p205 = scmp.eq.s32.totalorder %s21, 1
    %p206 = por %p204, %p205
    %p207 = scmp.ne.s32.totalorder %s198, %s199
    %p208 = scmp.eq.s32.totalorder %s21, 0
    %p209 = por %p207, %p208
    %p210 = scmp.ne.s32.totalorder %s198, %s199
    %p211 = scmp.eq.s32.totalorder %s22, 1
    %p212 = por %p210, %p211
    %p214 = scmp.ne.s32.totalorder %s199, %s213
    %p215 = scmp.eq.s32.totalorder %s22, 0
    %p216 = por %p214, %p215
    %s218 = sadd.s32 %s217, 1
    %p221 = scmp.eq.s32.totalorder %s16, 1
    %p222 = scmp.ne.s32.totalorder %s217, %s219
    %p223 = scmp.eq.s32.totalorder %s16, 0
    %p224 = por %p222, %p223
    %p225 = scmp.ne.s32.totalorder %s217, %s219
    %p226 = scmp.eq.s32.totalorder %s21, 1
    %p227 = por %p225, %p226
    %p228 = scmp.ne.s32.totalorder %s219, %s220
    %p229 = scmp.eq.s32.totalorder %s21, 0
    %p230 = por %p228, %p229
    %p231 = scmp.ne.s32.totalorder %s219, %s220
    %p232 = scmp.eq.s32.totalorder %s22, 1
    %p233 = por %p231, %p232
    %p235 = scmp.ne.s32.totalorder %s220, %s234
    %p236 = scmp.eq.s32.totalorder %s22, 0
    %p237 = por %p235, %p236
    %s239 = sadd.s32 %s238, 1
    %p242 = scmp.eq.s32.totalorder %s16, 1
    %p243 = scmp.ne.s32.totalorder %s238, %s240
    %p244 = scmp.eq.s32.totalorder %s16, 0
    %p245 = por %p243, %p244
    %p246 = scmp.ne.s32.totalorder %s238, %s240
    %p247 = scmp.eq.s32.totalorder %s21, 1
    %p248 = por %p246, %p247
    %p249 = scmp.ne.s32.totalorder %s240, %s241
    %p250 = scmp.eq.s32.totalorder %s21, 0
    %p251 = por %p249, %p250
    %p252 = scmp.ne.s32.totalorder %s240, %s241
    %p253 = scmp.eq.s32.totalorder %s22, 1
    %p254 = por %p252, %p253
    %p256 = scmp.ne.s32.totalorder %s241, %s255
    %p257 = scmp.eq.s32.totalorder %s22, 0
    %p258 = por %p256, %p257
    %s259 = ssub.s32 %s16, %s23
    %p260 = scmp.eq.s32.totalorder %s259, 0
    %s262 = sadd.s32 %s261, 1
    %s263 = scalar_select %p260, %s261, %s262
    %p266 = pneg %p260
    %p267 = scmp.eq.s32.totalorder %s16, 1
    %p268 = por %p266, %p267
    %p269 = scmp.ne.s32.totalorder %s261, %s264
    %p270 = scmp.eq.s32.totalorder %s16, 0
    %p271 = por %p269, %p270
    %p272 = scmp.ne.s32.totalorder %s261, %s264
    %p273 = scmp.eq.s32.totalorder %s21, 1
    %p274 = por %p272, %p273
    %p275 = scmp.ne.s32.totalorder %s264, %s265
    %p276 = scmp.eq.s32.totalorder %s21, 0
    %p277 = por %p275, %p276
    %p278 = scmp.ne.s32.totalorder %s264, %s265
    %p279 = scmp.eq.s32.totalorder %s22, 1
    %p280 = por %p278, %p279
    %p282 = scmp.ne.s32.totalorder %s265, %s281
    %p283 = scmp.eq.s32.totalorder %s22, 0
    %p284 = por %p282, %p283
    %p285 = scmp.le.s32.totalorder 1, %s16
    %p286 = scmp.lt.s32.totalorder %s16, 3
    %p287 = pnand %p285, %p286
    %p288 = pneg %p287
    // Predicated region
    $region9: #{nmt_forward.5} parent=5 // pred_check
      _
    $region10: #{nmt_forward.5} parent=5 // pred_check_branch
      %290 = sbr.rel (%p287) target = $region12
    $region11: #{nmt_forward.5} parent=5 // pred_region
      %s291 = ssub.s32 %s16, 1
      // Predicated region
      $region13: #{nmt_forward.5} parent=11 // pred_check
        %p292 = pneg %p167
      $region14: #{nmt_forward.5} parent=11 // pred_check_branch
        %294 = sbr.rel (%p292) target = $region16
      $region15: #{nmt_forward.5} parent=11 // pred_region
        _
      $region16: #{nmt_forward.5} parent=11 // pred_fallthru
        _
      // Predicated region
      $region17: #{nmt_forward.5} parent=11 // pred_check
        %p295 = pneg %p188
      $region18: #{nmt_forward.5} parent=11 // pred_check_branch
        %297 = sbr.rel (%p295) target = $region20
      $region19: #{nmt_forward.5} parent=11 // pred_region
        _
      $region20: #{nmt_forward.5} parent=11 // pred_fallthru
        _
      // Predicated region
      $region21: #{nmt_forward.5} parent=11 // pred_check
        %p298 = pneg %p209
      $region22: #{nmt_forward.5} parent=11 // pred_check_branch
        %300 = sbr.rel (%p298) target = $region24
      $region23: #{nmt_forward.5} parent=11 // pred_region
        _
      $region24: #{nmt_forward.5} parent=11 // pred_fallthru
        _
      // Predicated region
      $region25: #{nmt_forward.5} parent=11 // pred_check
        %p301 = pneg %p230
      $region26: #{nmt_forward.5} parent=11 // pred_check_branch
        %303 = sbr.rel (%p301) target = $region28
      $region27: #{nmt_forward.5} parent=11 // pred_region
        _
      $region28: #{nmt_forward.5} parent=11 // pred_fallthru
        _
      // Predicated region
      $region29: #{nmt_forward.5} parent=11 // pred_check
        %p304 = pneg %p251
      $region30: #{nmt_forward.5} parent=11 // pred_check_branch
        %306 = sbr.rel (%p304) target = $region32
      $region31: #{nmt_forward.5} parent=11 // pred_region
        _
      $region32: #{nmt_forward.5} parent=11 // pred_fallthru
        _
    $region12: #{nmt_forward.5} parent=5 // pred_fallthru
      _
    %p307 = scmp.lt.s32.totalorder %s16, 2
    // Predicated region
    $region33: #{nmt_forward.5} parent=5 // pred_check
      %p308 = pneg %p307
    $region34: #{nmt_forward.5} parent=5 // pred_check_branch
      %310 = sbr.rel (%p308) target = $region36
    $region35: #{nmt_forward.5} parent=5 // pred_region
      // Predicated region
      $region37: #{nmt_forward.5} parent=35 // pred_check
        %p311 = pneg %p36
      $region38: #{nmt_forward.5} parent=35 // pred_check_branch
        %313 = sbr.rel (%p311) target = $region40
      $region39: #{nmt_forward.5} parent=35 // pred_region
        %p314 = scmp.lt.s32.totalorder %s16, 1
        %s315 = scalar_select %p314, %s16, 1
        %s316 = smul.addr %s315, 8
        %s317 = scalar_lea.vmem %s0, %s316
      $region40: #{nmt_forward.5} parent=35 // pred_fallthru
        _
      // Predicated region
      $region41: #{nmt_forward.5} parent=35 // pred_check
        %p318 = pneg %p62
      $region42: #{nmt_forward.5} parent=35 // pred_check_branch
        %320 = sbr.rel (%p318) target = $region44
      $region43: #{nmt_forward.5} parent=35 // pred_region
        %p321 = scmp.lt.s32.totalorder %s16, 1
        %s322 = scalar_select %p321, %s16, 1
        %s323 = smul.addr %s322, 2
        %s324 = smul.addr %s323, 8
        %s325 = scalar_lea.vmem %s1, %s324
      $region44: #{nmt_forward.5} parent=35 // pred_fallthru
        _
      // Predicated region
      $region45: #{nmt_forward.5} parent=35 // pred_check
        %p326 = pneg %p88
      $region46: #{nmt_forward.5} parent=35 // pred_check_branch
        %328 = sbr.rel (%p326) target = $region48
      $region47: #{nmt_forward.5} parent=35 // pred_region
        %p329 = scmp.lt.s32.totalorder %s16, 1
        %s330 = scalar_select %p329, %s16, 1
        %s331 = smul.addr %s330, 2
        %s332 = smul.addr %s331, 8
        %s333 = scalar_lea.vmem %s2, %s332
      $region48: #{nmt_forward.5} parent=35 // pred_fallthru
        _
      // Predicated region
      $region49: #{nmt_forward.5} parent=35 // pred_check
        %p334 = pneg %p114
      $region50: #{nmt_forward.5} parent=35 // pred_check_branch
        %336 = sbr.rel (%p334) target = $region52
      $region51: #{nmt_forward.5} parent=35 // pred_region
        %p337 = scmp.lt.s32.totalorder %s16, 1
        %s338 = scalar_select %p337, %s16, 1
        %s339 = scalar_lea.vmem %s3, %s338
      $region52: #{nmt_forward.5} parent=35 // pred_fallthru
        _
      // Predicated region
      $region53: #{nmt_forward.5} parent=35 // pred_check
        %p340 = pneg %p140
      $region54: #{nmt_forward.5} parent=35 // pred_check_branch
        %342 = sbr.rel (%p340) target = $region56
      $region55: #{nmt_forward.5} parent=35 // pred_region
        %p343 = scmp.lt.s32.totalorder %s16, 1
        %s344 = scalar_select %p343, %s16, 1
        %s345 = smul.addr %s344, 8
        %s346 = scalar_lea.vmem %s4, %s345
      $region56: #{nmt_forward.5} parent=35 // pred_fallthru
        _
    $region36: #{nmt_forward.5} parent=5 // pred_fallthru
      _
    %p347 = scmp.le.s32.totalorder 1, %s16
    %p348 = scmp.lt.s32.totalorder %s16, 3
    %p349 = pnand %p347, %p348
    %p350 = pneg %p349
    // Predicated region
    $region57: #{nmt_forward.5} parent=5 // pred_check
      _
    $region58: #{nmt_forward.5} parent=5 // pred_check_branch
      %352 = sbr.rel (%p349) target = $region60
    $region59: #{nmt_forward.5} parent=5 // pred_region
      %s353 = ssub.s32 %s16, 1
      %p354 = scmp.lt.s32.totalorder %s21, 1
      %s355 = scalar_select %p354, %s21, 1
      %s356 = smul.addr %s355, 8
      %s357 = scalar_lea.vmem %s0, %s356
      %p358 = pneg %p42
      %p359 = pneg %p39
      %p360 = scmp.lt.s32.totalorder %s21, 1
      %s361 = scalar_select %p360, %s21, 1
      %s362 = smul.addr %s361, 2
      %s363 = smul.addr %s362, 8
      %s364 = scalar_lea.vmem %s1, %s363
      %p365 = pneg %p68
      %p366 = pneg %p65
      %p367 = scmp.lt.s32.totalorder %s21, 1
      %s368 = scalar_select %p367, %s21, 1
      %s369 = smul.addr %s368, 2
      %s370 = smul.addr %s369, 8
      %s371 = scalar_lea.vmem %s2, %s370
      %p372 = pneg %p94
      %p373 = pneg %p91
      %p374 = scmp.lt.s32.totalorder %s21, 1
      %s375 = scalar_select %p374, %s21, 1
      %s376 = scalar_lea.vmem %s3, %s375
      %p377 = pneg %p120
      %p378 = pneg %p117
      %p379 = scmp.lt.s32.totalorder %s21, 1
      %s380 = scalar_select %p379, %s21, 1
      %s381 = smul.addr %s380, 8
      %s382 = scalar_lea.vmem %s4, %s381
      %p383 = pneg %p146
      %p384 = pneg %p143
      %p385 = pneg %p167
      %p386 = pneg %p164
      %p387 = pneg %p188
      %p388 = pneg %p185
      %p389 = pneg %p209
      %p390 = pneg %p206
      %p391 = pneg %p230
      %p392 = pneg %p227
      %p393 = pneg %p251
      %p394 = pneg %p248
      %p395 = pneg %p277
      %p396 = pneg %p274
      %p397 = scmp.lt.s32.totalorder %s21, 1
      %s398 = scalar_select %p397, %s21, 1
      %s399 = scalar_lea.vmem %s10, %s398
      %p400 = scmp.lt.s32.totalorder %s21, 1
      %s401 = scalar_select %p400, %s21, 1
      %s402 = smul.addr %s401, 8
      %s403 = scalar_lea.vmem %s0, %s402
      %p404 = scmp.lt.s32.totalorder %s21, 1
      %s405 = scalar_select %p404, %s21, 1
      %s406 = smul.addr %s405, 2
      %s407 = smul.addr %s406, 8
      %s408 = scalar_lea.vmem %s1, %s407
      %p409 = scmp.lt.s32.totalorder %s21, 1
      %s410 = scalar_select %p409, %s21, 1
      %s411 = smul.addr %s410, 2
      %s412 = smul.addr %s411, 8
      %s413 = scalar_lea.vmem %s2, %s412
      %p414 = scmp.lt.s32.totalorder %s21, 1
      %s415 = scalar_select %p414, %s21, 1
      %s416 = scalar_lea.vmem %s3, %s415
      %p417 = scmp.lt.s32.totalorder %s21, 1
      %s418 = scalar_select %p417, %s21, 1
      %s419 = smul.addr %s418, 8
      %s420 = scalar_lea.vmem %s4, %s419
      %p421 = scmp.lt.s32.totalorder %s21, 1
      %s422 = scalar_select %p421, %s21, 1
      %s423 = scalar_lea.vmem %s10, %s422
      %v424 = vld [vmem:[%s403] sm:$0xff]
      %v425 = vld [vmem:[%s408] sm:$0xff]
      %v426 = vld [vmem:[%s408 + $0x8] sm:$0x3]
      %v427 = vld [vmem:[%s413] sm:$0xff]
      %v428 = vld [vmem:[%s413 + $0x8] sm:$0x3]
      %v429 = vld [vmem:[%s416] sm:$0x1]
      %v430 = vld [vmem:[%s420] sm:$0xff]
      %v431 = vld [vmem:[%s5] sm:$0xff]
      %v432 = vld [vmem:[%s5 + $0x8] sm:$0xff]
      %v433 = vld [vmem:[%s5 + $0x10] sm:$0xff]
      %v434 = vld [vmem:[%s5 + $0x18] sm:$0xff]
      %vm435 = vcmask 261120
      %v437 = vsel %vm435, %v424, 0
      %439 = vmatprep.subr.mxu0 0.0
      %440 = vmatpush1.msra.mxu0 0.0
      %441 = vmatprep.subr.mxu0 0.0
      %442 = vmatpush1.msra.mxu0 0.0
      %443 = vmatprep.subr.mxu0 0.0
      %444 = vmatpush1.msra.mxu0 0.0
      %445 = vmatprep.subr.mxu0 0.0
      %446 = vmatpush1.msra.mxu0 0.0
      %447 = vmatprep.subr.mxu0 0.0
      %448 = vmatpush1.msra.mxu0 0.0
      %449 = vmatprep.subr.mxu0 0.0
      %450 = vmatpush1.msra.mxu0 0.0
      %451 = vmatprep.subr.mxu0 0.0
      %452 = vmatpush1.msra.mxu0 0.0
      %453 = vmatprep.subr.mxu0 0.0
      %454 = vmatpush1.msra.mxu0 0.0
      %455 = vmatprep.subr.mxu0 0.0
      %456 = vmatpush1.msra.mxu0 0.0
      %457 = vmatprep.subr.mxu0 0.0
      %458 = vmatpush1.msra.mxu0 0.0
      %459 = vmatprep.subr.mxu0 0.0
      %460 = vmatpush1.msra.mxu0 0.0
      %461 = vmatprep.subr.mxu0 0.0
      %462 = vmatpush1.msra.mxu0 0.0
      %463 = vmatprep.subr.mxu0 0.0
      %464 = vmatpush1.msra.mxu0 %v434
      %465 = vmatprep.subr.mxu0 0.0
      %466 = vmatpush1.msra.mxu0 %v433
      %467 = vmatprep.subr.mxu0 0.0
      %468 = vmatpush1.msra.mxu0 %v432
      %469 = vmatprep.subr.mxu0 0.0
      %470 = vmatpush1.msra.mxu0 %v431
      %471 = vmatprep.subr.mxu0 0.0
      %472 = vmatpush2.msra.mxu0 0.0
      %473 = vmatprep.subr.mxu0 0.0
      %474 = vmatpush2.msra.mxu0 0.0
      %475 = vmatprep.subr.mxu0 0.0
      %476 = vmatpush2.msra.mxu0 0.0
      %477 = vmatprep.subr.mxu0 0.0
      %478 = vmatpush2.msra.mxu0 0.0
      %479 = vmatprep.subr.mxu0 0.0
      %480 = vmatpush2.msra.mxu0 0.0
      %481 = vmatprep.subr.mxu0 0.0
      %482 = vmatpush2.msra.mxu0 0.0
      %483 = vmatprep.subr.mxu0 0.0
      %484 = vmatpush2.msra.mxu0 0.0
      %485 = vmatprep.subr.mxu0 0.0
      %486 = vmatpush2.msra.mxu0 0.0
      %487 = vmatprep.subr.mxu0 0.0
      %488 = vmatpush2.msra.mxu0 0.0
      %489 = vmatprep.subr.mxu0 0.0
      %490 = vmatpush2.msra.mxu0 0.0
      %491 = vmatprep.subr.mxu0 0.0
      %492 = vmatpush2.msra.mxu0 0.0
      %493 = vmatprep.subr.mxu0 0.0
      %494 = vmatpush2.msra.mxu0 0.0
      %495 = vmatprep.subr.mxu0 0.0
      %496 = vmatpush2.msra.mxu0 0.0
      %497 = vmatprep.subr.mxu0 0.0
      %498 = vmatpush2.msra.mxu0 0.0
      %499 = vmatprep.subr.mxu0 0.0
      %500 = vmatpush2.msra.mxu0 0.0
      %501 = vmatprep.subr.mxu0 0.0
      %502 = vmatpush2.msra.mxu0 0.0
      %503 = vmatprep.mubr.f32.mxu0 0.0
      %504 = vmatmul.mubr.f32.gmra.mxu0 %v437
      %v505 = vpop.f32.mrf.mxu0
      %v506 = vadd.f32 0.0, %v505
      %v507 = vpop.f32.mrf.mxu0
      %508 = vdwg.mxu0
      %510 = vrot.lane.b32.xlu0 %v506, 96
      %v511 = vpop.permute.xlu0 %510
      %v512 = vsel %vm435, %v511, 0
      %v515 = vsel %vm435, %v427, 0
      %v518 = vsel %vm435, %v428, 0
      %520 = vmatprep.subr.mxu0 0.0
      %521 = vmatpush1.xpose.msra.mxu0 0.0
      %522 = vmatprep.subr.mxu0 0.0
      %523 = vmatpush1.xpose.msra.mxu0 0.0
      %524 = vmatprep.subr.mxu0 0.0
      %525 = vmatpush1.xpose.msra.mxu0 0.0
      %526 = vmatprep.subr.mxu0 0.0
      %527 = vmatpush1.xpose.msra.mxu0 0.0
      %528 = vmatprep.subr.mxu0 0.0
      %529 = vmatpush1.xpose.msra.mxu0 0.0
      %530 = vmatprep.subr.mxu0 0.0
      %531 = vmatpush1.xpose.msra.mxu0 0.0
      %532 = vmatprep.subr.mxu0 0.0
      %533 = vmatpush1.xpose.msra.mxu0 0.0
      %534 = vmatprep.subr.mxu0 0.0
      %535 = vmatpush1.xpose.msra.mxu0 0.0
      %536 = vmatprep.subr.mxu0 0.0
      %537 = vmatpush1.xpose.msra.mxu0 0.0
      %538 = vmatprep.subr.mxu0 0.0
      %539 = vmatpush1.xpose.msra.mxu0 0.0
      %540 = vmatprep.subr.mxu0 0.0
      %541 = vmatpush1.xpose.msra.mxu0 0.0
      %542 = vmatprep.subr.mxu0 0.0
      %543 = vmatpush1.xpose.msra.mxu0 0.0
      %544 = vmatprep.subr.mxu0 0.0
      %545 = vmatpush1.xpose.msra.mxu0 0.0
      %546 = vmatprep.subr.mxu0 0.0
      %547 = vmatpush1.xpose.msra.mxu0 0.0
      %548 = vmatprep.subr.mxu0 0.0
      %549 = vmatpush1.xpose.msra.mxu0 %v518
      %550 = vmatprep.subr.mxu0 0.0
      %551 = vmatpush1.xpose.msra.mxu0 %v515
      %552 = vmatprep.subr.mxu0 0.0
      %553 = vmatpush2.xpose.msra.mxu0 0.0
      %554 = vmatprep.subr.mxu0 0.0
      %555 = vmatpush2.xpose.msra.mxu0 0.0
      %556 = vmatprep.subr.mxu0 0.0
      %557 = vmatpush2.xpose.msra.mxu0 0.0
      %558 = vmatprep.subr.mxu0 0.0
      %559 = vmatpush2.xpose.msra.mxu0 0.0
      %560 = vmatprep.subr.mxu0 0.0
      %561 = vmatpush2.xpose.msra.mxu0 0.0
      %562 = vmatprep.subr.mxu0 0.0
      %563 = vmatpush2.xpose.msra.mxu0 0.0
      %564 = vmatprep.subr.mxu0 0.0
      %565 = vmatpush2.xpose.msra.mxu0 0.0
      %566 = vmatprep.subr.mxu0 0.0
      %567 = vmatpush2.xpose.msra.mxu0 0.0
      %568 = vmatprep.subr.mxu0 0.0
      %569 = vmatpush2.xpose.msra.mxu0 0.0
      %570 = vmatprep.subr.mxu0 0.0
      %571 = vmatpush2.xpose.msra.mxu0 0.0
      %572 = vmatprep.subr.mxu0 0.0
      %573 = vmatpush2.xpose.msra.mxu0 0.0
      %574 = vmatprep.subr.mxu0 0.0
      %575 = vmatpush2.xpose.msra.mxu0 0.0
      %576 = vmatprep.subr.mxu0 0.0
      %577 = vmatpush2.xpose.msra.mxu0 0.0
      %578 = vmatprep.subr.mxu0 0.0
      %579 = vmatpush2.xpose.msra.mxu0 0.0
      %580 = vmatprep.subr.mxu0 0.0
      %581 = vmatpush2.xpose.msra.mxu0 0.0
      %582 = vmatprep.subr.mxu0 0.0
      %583 = vmatpush2.xpose.msra.mxu0 0.0
      %584 = vmatprep.mubr.f32.mxu0 0.0
      %585 = vmatmul.mubr.f32.gmra.mxu0 %v512
      %v586 = vpop.f32.mrf.mxu0
      %v587 = vadd.f32 0.0, %v586
      %v588 = vpop.f32.mrf.mxu0
      %589 = vdwg.mxu0
      %v590 = vsel %vm435, %v506, 0
      %v593 = vsel %vm435, %v425, 0
      %v596 = vsel %vm435, %v426, 0
      %598 = vmatprep.subr.mxu0 0.0
      %599 = vmatpush1.xpose.msra.mxu0 0.0
      %600 = vmatprep.subr.mxu0 0.0
      %601 = vmatpush1.xpose.msra.mxu0 0.0
      %602 = vmatprep.subr.mxu0 0.0
      %603 = vmatpush1.xpose.msra.mxu0 0.0
      %604 = vmatprep.subr.mxu0 0.0
      %605 = vmatpush1.xpose.msra.mxu0 0.0
      %606 = vmatprep.subr.mxu0 0.0
      %607 = vmatpush1.xpose.msra.mxu0 0.0
      %608 = vmatprep.subr.mxu0 0.0
      %609 = vmatpush1.xpose.msra.mxu0 0.0
      %610 = vmatprep.subr.mxu0 0.0
      %611 = vmatpush1.xpose.msra.mxu0 0.0
      %612 = vmatprep.subr.mxu0 0.0
      %613 = vmatpush1.xpose.msra.mxu0 0.0
      %614 = vmatprep.subr.mxu0 0.0
      %615 = vmatpush1.xpose.msra.mxu0 0.0
      %616 = vmatprep.subr.mxu0 0.0
      %617 = vmatpush1.xpose.msra.mxu0 0.0
      %618 = vmatprep.subr.mxu0 0.0
      %619 = vmatpush1.xpose.msra.mxu0 0.0
      %620 = vmatprep.subr.mxu0 0.0
      %621 = vmatpush1.xpose.msra.mxu0 0.0
      %622 = vmatprep.subr.mxu0 0.0
      %623 = vmatpush1.xpose.msra.mxu0 0.0
      %624 = vmatprep.subr.mxu0 0.0
      %625 = vmatpush1.xpose.msra.mxu0 0.0
      %626 = vmatprep.subr.mxu0 0.0
      %627 = vmatpush1.xpose.msra.mxu0 %v596
      %628 = vmatprep.subr.mxu0 0.0
      %629 = vmatpush1.xpose.msra.mxu0 %v593
      %630 = vmatprep.subr.mxu0 0.0
      %631 = vmatpush2.xpose.msra.mxu0 0.0
      %632 = vmatprep.subr.mxu0 0.0
      %633 = vmatpush2.xpose.msra.mxu0 0.0
      %634 = vmatprep.subr.mxu0 0.0
      %635 = vmatpush2.xpose.msra.mxu0 0.0
      %636 = vmatprep.subr.mxu0 0.0
      %637 = vmatpush2.xpose.msra.mxu0 0.0
      %638 = vmatprep.subr.mxu0 0.0
      %639 = vmatpush2.xpose.msra.mxu0 0.0
      %640 = vmatprep.subr.mxu0 0.0
      %641 = vmatpush2.xpose.msra.mxu0 0.0
      %642 = vmatprep.subr.mxu0 0.0
      %643 = vmatpush2.xpose.msra.mxu0 0.0
      %644 = vmatprep.subr.mxu0 0.0
      %645 = vmatpush2.xpose.msra.mxu0 0.0
      %646 = vmatprep.subr.mxu0 0.0
      %647 = vmatpush2.xpose.msra.mxu0 0.0
      %648 = vmatprep.subr.mxu0 0.0
      %649 = vmatpush2.xpose.msra.mxu0 0.0
      %650 = vmatprep.subr.mxu0 0.0
      %651 = vmatpush2.xpose.msra.mxu0 0.0
      %652 = vmatprep.subr.mxu0 0.0
      %653 = vmatpush2.xpose.msra.mxu0 0.0
      %654 = vmatprep.subr.mxu0 0.0
      %655 = vmatpush2.xpose.msra.mxu0 0.0
      %656 = vmatprep.subr.mxu0 0.0
      %657 = vmatpush2.xpose.msra.mxu0 0.0
      %658 = vmatprep.subr.mxu0 0.0
      %659 = vmatpush2.xpose.msra.mxu0 0.0
      %660 = vmatprep.subr.mxu0 0.0
      %661 = vmatpush2.xpose.msra.mxu0 0.0
      %662 = vmatprep.mubr.f32.mxu0 0.0
      %663 = vmatmul.mubr.f32.gmra.mxu0 %v590
      %v664 = vpop.f32.mrf.mxu0
      %v665 = vadd.f32 %v587, %v664
      %v666 = vpop.f32.mrf.mxu0
      %667 = vdwg.mxu0
      %vm668 = vcmp.gt.f32.partialorder %v429, 0.0
      %v669 = vsel %vm668, 1, 0
      %v670 = vlaneseq
      %v671 = vshrl.u32 %v670, 7
      %v672 = vsub.s32 0, %v671
      %v673 = vrot.slane %v669, %v672
      %vm674 = vcmp.eq.s32.totalorder %v673, 1
      %v675 = vsel %vm674, %v665, -1e+30
      %vm676 = vcmask 80896
      %v677 = vsel %vm676, %v675, -inf
      %678 = vmax.xlane.f32.xlu0 %v677
      %v679 = vpop.xlane.xlu0 %678
      %v680 = vsub.f32 %v675, %v679
      %v681 = vmul.f32 %v680, 1.442695
      %v682 = vpow.pop %v681
      %v683 = vsel %vm676, %v682, 0.0
      %684 = vadd.xlane.f32.xlu0 %v683
      %v685 = vpop.xlane.xlu0 %684
      %v686 = vrcp.pop %v685
      %v687 = vmul.f32 %v682, %v686
      %v689 = vsel %vm676, %v687, 0
      %vm691 = vcmask 1041408
      %v692 = vsel %vm691, %v426, 0
      %694 = vmatprep.subr.mxu0 0.0
      %695 = vmatpush1.msra.mxu0 0.0
      %696 = vmatprep.subr.mxu0 0.0
      %697 = vmatpush1.msra.mxu0 0.0
      %698 = vmatprep.subr.mxu0 0.0
      %699 = vmatpush1.msra.mxu0 0.0
      %700 = vmatprep.subr.mxu0 0.0
      %701 = vmatpush1.msra.mxu0 0.0
      %702 = vmatprep.subr.mxu0 0.0
      %703 = vmatpush1.msra.mxu0 0.0
      %704 = vmatprep.subr.mxu0 0.0
      %705 = vmatpush1.msra.mxu0 0.0
      %706 = vmatprep.subr.mxu0 0.0
      %707 = vmatpush1.msra.mxu0 0.0
      %708 = vmatprep.subr.mxu0 0.0
      %709 = vmatpush1.msra.mxu0 0.0
      %710 = vmatprep.subr.mxu0 0.0
      %711 = vmatpush1.msra.mxu0 0.0
      %712 = vmatprep.subr.mxu0 0.0
      %713 = vmatpush1.msra.mxu0 0.0
      %714 = vmatprep.subr.mxu0 0.0
      %715 = vmatpush1.msra.mxu0 0.0
      %716 = vmatprep.subr.mxu0 0.0
      %717 = vmatpush1.msra.mxu0 0.0
      %718 = vmatprep.subr.mxu0 0.0
      %719 = vmatpush1.msra.mxu0 0.0
      %720 = vmatprep.subr.mxu0 0.0
      %721 = vmatpush1.msra.mxu0 0.0
      %722 = vmatprep.subr.mxu0 0.0
      %723 = vmatpush1.msra.mxu0 %v692
      %724 = vmatprep.subr.mxu0 0.0
      %725 = vmatpush1.msra.mxu0 %v425
      %726 = vmatprep.subr.mxu0 0.0
      %727 = vmatpush2.msra.mxu0 0.0
      %728 = vmatprep.subr.mxu0 0.0
      %729 = vmatpush2.msra.mxu0 0.0
      %730 = vmatprep.subr.mxu0 0.0
      %731 = vmatpush2.msra.mxu0 0.0
      %732 = vmatprep.subr.mxu0 0.0
      %733 = vmatpush2.msra.mxu0 0.0
      %734 = vmatprep.subr.mxu0 0.0
      %735 = vmatpush2.msra.mxu0 0.0
      %736 = vmatprep.subr.mxu0 0.0
      %737 = vmatpush2.msra.mxu0 0.0
      %738 = vmatprep.subr.mxu0 0.0
      %739 = vmatpush2.msra.mxu0 0.0
      %740 = vmatprep.subr.mxu0 0.0
      %741 = vmatpush2.msra.mxu0 0.0
      %742 = vmatprep.subr.mxu0 0.0
      %743 = vmatpush2.msra.mxu0 0.0
      %744 = vmatprep.subr.mxu0 0.0
      %745 = vmatpush2.msra.mxu0 0.0
      %746 = vmatprep.subr.mxu0 0.0
      %747 = vmatpush2.msra.mxu0 0.0
      %748 = vmatprep.subr.mxu0 0.0
      %749 = vmatpush2.msra.mxu0 0.0
      %750 = vmatprep.subr.mxu0 0.0
      %751 = vmatpush2.msra.mxu0 0.0
      %752 = vmatprep.subr.mxu0 0.0
      %753 = vmatpush2.msra.mxu0 0.0
      %754 = vmatprep.subr.mxu0 0.0
      %755 = vmatpush2.msra.mxu0 0.0
      %756 = vmatprep.subr.mxu0 0.0
      %757 = vmatpush2.msra.mxu0 0.0
      %758 = vmatprep.mubr.f32.mxu0 0.0
      %759 = vmatmul.mubr.f32.gmra.mxu0 %v689
      %v760 = vpop.f32.mrf.mxu0
      %v761 = vadd.f32 0.0, %v760
      %v762 = vpop.f32.mrf.mxu0
      %763 = vdwg.mxu0
      %v764 = vsel %vm691, %v428, 0
      %766 = vmatprep.subr.mxu0 0.0
      %767 = vmatpush1.msra.mxu0 0.0
      %768 = vmatprep.subr.mxu0 0.0
      %769 = vmatpush1.msra.mxu0 0.0
      %770 = vmatprep.subr.mxu0 0.0
      %771 = vmatpush1.msra.mxu0 0.0
      %772 = vmatprep.subr.mxu0 0.0
      %773 = vmatpush1.msra.mxu0 0.0
      %774 = vmatprep.subr.mxu0 0.0
      %775 = vmatpush1.msra.mxu0 0.0
      %776 = vmatprep.subr.mxu0 0.0
      %777 = vmatpush1.msra.mxu0 0.0
      %778 = vmatprep.subr.mxu0 0.0
      %779 = vmatpush1.msra.mxu0 0.0
      %780 = vmatprep.subr.mxu0 0.0
      %781 = vmatpush1.msra.mxu0 0.0
      %782 = vmatprep.subr.mxu0 0.0
      %783 = vmatpush1.msra.mxu0 0.0
      %784 = vmatprep.subr.mxu0 0.0
      %785 = vmatpush1.msra.mxu0 0.0
      %786 = vmatprep.subr.mxu0 0.0
      %787 = vmatpush1.msra.mxu0 0.0
      %788 = vmatprep.subr.mxu0 0.0
      %789 = vmatpush1.msra.mxu0 0.0
      %790 = vmatprep.subr.mxu0 0.0
      %791 = vmatpush1.msra.mxu0 0.0
      %792 = vmatprep.subr.mxu0 0.0
      %793 = vmatpush1.msra.mxu0 0.0
      %794 = vmatprep.subr.mxu0 0.0
      %795 = vmatpush1.msra.mxu0 %v764
      %796 = vmatprep.subr.mxu0 0.0
      %797 = vmatpush1.msra.mxu0 %v427
      %798 = vmatprep.subr.mxu0 0.0
      %799 = vmatpush2.msra.mxu0 0.0
      %800 = vmatprep.subr.mxu0 0.0
      %801 = vmatpush2.msra.mxu0 0.0
      %802 = vmatprep.subr.mxu0 0.0
      %803 = vmatpush2.msra.mxu0 0.0
      %804 = vmatprep.subr.mxu0 0.0
      %805 = vmatpush2.msra.mxu0 0.0
      %806 = vmatprep.subr.mxu0 0.0
      %807 = vmatpush2.msra.mxu0 0.0
      %808 = vmatprep.subr.mxu0 0.0
      %809 = vmatpush2.msra.mxu0 0.0
      %810 = vmatprep.subr.mxu0 0.0
      %811 = vmatpush2.msra.mxu0 0.0
      %812 = vmatprep.subr.mxu0 0.0
      %813 = vmatpush2.msra.mxu0 0.0
      %814 = vmatprep.subr.mxu0 0.0
      %815 = vmatpush2.msra.mxu0 0.0
      %816 = vmatprep.subr.mxu0 0.0
      %817 = vmatpush2.msra.mxu0 0.0
      %818 = vmatprep.subr.mxu0 0.0
      %819 = vmatpush2.msra.mxu0 0.0
      %820 = vmatprep.subr.mxu0 0.0
      %821 = vmatpush2.msra.mxu0 0.0
      %822 = vmatprep.subr.mxu0 0.0
      %823 = vmatpush2.msra.mxu0 0.0
      %824 = vmatprep.subr.mxu0 0.0
      %825 = vmatpush2.msra.mxu0 0.0
      %826 = vmatprep.subr.mxu0 0.0
      %827 = vmatpush2.msra.mxu0 0.0
      %828 = vmatprep.subr.mxu0 0.0
      %829 = vmatpush2.msra.mxu0 0.0
      %830 = vmatprep.mubr.f32.mxu0 0.0
      %831 = vmatmul.mubr.f32.gmra.mxu0 %v689
      %v832 = vpop.f32.mrf.mxu0
      %v833 = vadd.f32 0.0, %v832
      %v834 = vpop.f32.mrf.mxu0
      %835 = vdwg.mxu0
      %v836 = vld [vmem:[%s7] sm:$0xff]
      %v837 = vld [vmem:[%s7 + $0x8] sm:$0xff]
      %v838 = vld [vmem:[%s7 + $0x10] sm:$0xff]
      %v839 = vld [vmem:[%s7 + $0x18] sm:$0xff]
      %v840 = vld [vmem:[%s7 + $0x20] sm:$0xff]
      %v841 = vld [vmem:[%s7 + $0x28] sm:$0xff]
      %v842 = vld [vmem:[%s7 + $0x30] sm:$0xff]
      %v843 = vld [vmem:[%s7 + $0x38] sm:$0xff]
      %v844 = vld [vmem:[%s6] sm:$0xff]
      %v845 = vld [vmem:[%s6 + $0x8] sm:$0xff]
      %v846 = vld [vmem:[%s6 + $0x10] sm:$0xff]
      %v847 = vld [vmem:[%s6 + $0x18] sm:$0xff]
      %v849 = vsel %vm435, %v761, 0
      %851 = vmatprep.subr.mxu0 0.0
      %852 = vmatpush1.msra.mxu0 0.0
      %853 = vmatprep.subr.mxu0 0.0
      %854 = vmatpush1.msra.mxu0 0.0
      %855 = vmatprep.subr.mxu0 0.0
      %856 = vmatpush1.msra.mxu0 0.0
      %857 = vmatprep.subr.mxu0 0.0
      %858 = vmatpush1.msra.mxu0 0.0
      %859 = vmatprep.subr.mxu0 0.0
      %860 = vmatpush1.msra.mxu0 0.0
      %861 = vmatprep.subr.mxu0 0.0
      %862 = vmatpush1.msra.mxu0 0.0
      %863 = vmatprep.subr.mxu0 0.0
      %864 = vmatpush1.msra.mxu0 0.0
      %865 = vmatprep.subr.mxu0 0.0
      %866 = vmatpush1.msra.mxu0 0.0
      %867 = vmatprep.subr.mxu0 0.0
      %868 = vmatpush1.msra.mxu0 0.0
      %869 = vmatprep.subr.mxu0 0.0
      %870 = vmatpush1.msra.mxu0 0.0
      %871 = vmatprep.subr.mxu0 0.0
      %872 = vmatpush1.msra.mxu0 0.0
      %873 = vmatprep.subr.mxu0 0.0
      %874 = vmatpush1.msra.mxu0 0.0
      %875 = vmatprep.subr.mxu0 0.0
      %876 = vmatpush1.msra.mxu0 %v839
      %877 = vmatprep.subr.mxu0 0.0
      %878 = vmatpush1.msra.mxu0 %v838
      %879 = vmatprep.subr.mxu0 0.0
      %880 = vmatpush1.msra.mxu0 %v837
      %881 = vmatprep.subr.mxu0 0.0
      %882 = vmatpush1.msra.mxu0 %v836
      %883 = vmatprep.subr.mxu0 0.0
      %884 = vmatpush2.msra.mxu0 0.0
      %885 = vmatprep.subr.mxu0 0.0
      %886 = vmatpush2.msra.mxu0 0.0
      %887 = vmatprep.subr.mxu0 0.0
      %888 = vmatpush2.msra.mxu0 0.0
      %889 = vmatprep.subr.mxu0 0.0
      %890 = vmatpush2.msra.mxu0 0.0
      %891 = vmatprep.subr.mxu0 0.0
      %892 = vmatpush2.msra.mxu0 0.0
      %893 = vmatprep.subr.mxu0 0.0
      %894 = vmatpush2.msra.mxu0 0.0
      %895 = vmatprep.subr.mxu0 0.0
      %896 = vmatpush2.msra.mxu0 0.0
      %897 = vmatprep.subr.mxu0 0.0
      %898 = vmatpush2.msra.mxu0 0.0
      %899 = vmatprep.subr.mxu0 0.0
      %900 = vmatpush2.msra.mxu0 0.0
      %901 = vmatprep.subr.mxu0 0.0
      %902 = vmatpush2.msra.mxu0 0.0
      %903 = vmatprep.subr.mxu0 0.0
      %904 = vmatpush2.msra.mxu0 0.0
      %905 = vmatprep.subr.mxu0 0.0
      %906 = vmatpush2.msra.mxu0 0.0
      %907 = vmatprep.subr.mxu0 0.0
      %908 = vmatpush2.msra.mxu0 0.0
      %909 = vmatprep.subr.mxu0 0.0
      %910 = vmatpush2.msra.mxu0 0.0
      %911 = vmatprep.subr.mxu0 0.0
      %912 = vmatpush2.msra.mxu0 0.0
      %913 = vmatprep.subr.mxu0 0.0
      %914 = vmatpush2.msra.mxu0 0.0
      %915 = vmatprep.mubr.f32.mxu0 0.0
      %916 = vmatmul.mubr.f32.gmra.mxu0 %v849
      %v917 = vpop.f32.mrf.mxu0
      %v918 = vadd.f32 0.0, %v917
      %v919 = vpop.f32.mrf.mxu0
      %920 = vdwg.mxu0
      %921 = vmatprep.subr.mxu0 0.0
      %922 = vmatpush1.msra.mxu0 0.0
      %923 = vmatprep.subr.mxu0 0.0
      %924 = vmatpush1.msra.mxu0 0.0
      %925 = vmatprep.subr.mxu0 0.0
      %926 = vmatpush1.msra.mxu0 0.0
      %927 = vmatprep.subr.mxu0 0.0
      %928 = vmatpush1.msra.mxu0 0.0
      %929 = vmatprep.subr.mxu0 0.0
      %930 = vmatpush1.msra.mxu0 0.0
      %931 = vmatprep.subr.mxu0 0.0
      %932 = vmatpush1.msra.mxu0 0.0
      %933 = vmatprep.subr.mxu0 0.0
      %934 = vmatpush1.msra.mxu0 0.0
      %935 = vmatprep.subr.mxu0 0.0
      %936 = vmatpush1.msra.mxu0 0.0
      %937 = vmatprep.subr.mxu0 0.0
      %938 = vmatpush1.msra.mxu0 0.0
      %939 = vmatprep.subr.mxu0 0.0
      %940 = vmatpush1.msra.mxu0 0.0
      %941 = vmatprep.subr.mxu0 0.0
      %942 = vmatpush1.msra.mxu0 0.0
      %943 = vmatprep.subr.mxu0 0.0
      %944 = vmatpush1.msra.mxu0 0.0
      %945 = vmatprep.subr.mxu0 0.0
      %946 = vmatpush1.msra.mxu0 %v847
      %947 = vmatprep.subr.mxu0 0.0
      %948 = vmatpush1.msra.mxu0 %v846
      %949 = vmatprep.subr.mxu0 0.0
      %950 = vmatpush1.msra.mxu0 %v845
      %951 = vmatprep.subr.mxu0 0.0
      %952 = vmatpush1.msra.mxu0 %v844
      %953 = vmatprep.subr.mxu0 0.0
      %954 = vmatpush2.msra.mxu0 0.0
      %955 = vmatprep.subr.mxu0 0.0
      %956 = vmatpush2.msra.mxu0 0.0
      %957 = vmatprep.subr.mxu0 0.0
      %958 = vmatpush2.msra.mxu0 0.0
      %959 = vmatprep.subr.mxu0 0.0
      %960 = vmatpush2.msra.mxu0 0.0
      %961 = vmatprep.subr.mxu0 0.0
      %962 = vmatpush2.msra.mxu0 0.0
      %963 = vmatprep.subr.mxu0 0.0
      %964 = vmatpush2.msra.mxu0 0.0
      %965 = vmatprep.subr.mxu0 0.0
      %966 = vmatpush2.msra.mxu0 0.0
      %967 = vmatprep.subr.mxu0 0.0
      %968 = vmatpush2.msra.mxu0 0.0
      %969 = vmatprep.subr.mxu0 0.0
      %970 = vmatpush2.msra.mxu0 0.0
      %971 = vmatprep.subr.mxu0 0.0
      %972 = vmatpush2.msra.mxu0 0.0
      %973 = vmatprep.subr.mxu0 0.0
      %974 = vmatpush2.msra.mxu0 0.0
      %975 = vmatprep.subr.mxu0 0.0
      %976 = vmatpush2.msra.mxu0 0.0
      %977 = vmatprep.subr.mxu0 0.0
      %978 = vmatpush2.msra.mxu0 0.0
      %979 = vmatprep.subr.mxu0 0.0
      %980 = vmatpush2.msra.mxu0 0.0
      %981 = vmatprep.subr.mxu0 0.0
      %982 = vmatpush2.msra.mxu0 0.0
      %983 = vmatprep.subr.mxu0 0.0
      %984 = vmatpush2.msra.mxu0 0.0
      %985 = vmatprep.mubr.f32.mxu0 0.0
      %986 = vmatmul.mubr.f32.gmra.mxu0 %v437
      %v987 = vpop.f32.mrf.mxu0
      %v988 = vadd.f32 %v918, %v987
      %v989 = vpop.f32.mrf.mxu0
      %990 = vdwg.mxu0
      %v992 = vsel %vm435, %v833, 0
      %994 = vmatprep.subr.mxu0 0.0
      %995 = vmatpush1.msra.mxu0 0.0
      %996 = vmatprep.subr.mxu0 0.0
      %997 = vmatpush1.msra.mxu0 0.0
      %998 = vmatprep.subr.mxu0 0.0
      %999 = vmatpush1.msra.mxu0 0.0
      %1000 = vmatprep.subr.mxu0 0.0
      %1001 = vmatpush1.msra.mxu0 0.0
      %1002 = vmatprep.subr.mxu0 0.0
      %1003 = vmatpush1.msra.mxu0 0.0
      %1004 = vmatprep.subr.mxu0 0.0
      %1005 = vmatpush1.msra.mxu0 0.0
      %1006 = vmatprep.subr.mxu0 0.0
      %1007 = vmatpush1.msra.mxu0 0.0
      %1008 = vmatprep.subr.mxu0 0.0
      %1009 = vmatpush1.msra.mxu0 0.0
      %1010 = vmatprep.subr.mxu0 0.0
      %1011 = vmatpush1.msra.mxu0 0.0
      %1012 = vmatprep.subr.mxu0 0.0
      %1013 = vmatpush1.msra.mxu0 0.0
      %1014 = vmatprep.subr.mxu0 0.0
      %1015 = vmatpush1.msra.mxu0 0.0
      %1016 = vmatprep.subr.mxu0 0.0
      %1017 = vmatpush1.msra.mxu0 0.0
      %1018 = vmatprep.subr.mxu0 0.0
      %1019 = vmatpush1.msra.mxu0 %v843
      %1020 = vmatprep.subr.mxu0 0.0
      %1021 = vmatpush1.msra.mxu0 %v842
      %1022 = vmatprep.subr.mxu0 0.0
      %1023 = vmatpush1.msra.mxu0 %v841
      %1024 = vmatprep.subr.mxu0 0.0
      %1025 = vmatpush1.msra.mxu0 %v840
      %1026 = vmatprep.subr.mxu0 0.0
      %1027 = vmatpush2.msra.mxu0 0.0
      %1028 = vmatprep.subr.mxu0 0.0
      %1029 = vmatpush2.msra.mxu0 0.0
      %1030 = vmatprep.subr.mxu0 0.0
      %1031 = vmatpush2.msra.mxu0 0.0
      %1032 = vmatprep.subr.mxu0 0.0
      %1033 = vmatpush2.msra.mxu0 0.0
      %1034 = vmatprep.subr.mxu0 0.0
      %1035 = vmatpush2.msra.mxu0 0.0
      %1036 = vmatprep.subr.mxu0 0.0
      %1037 = vmatpush2.msra.mxu0 0.0
      %1038 = vmatprep.subr.mxu0 0.0
      %1039 = vmatpush2.msra.mxu0 0.0
      %1040 = vmatprep.subr.mxu0 0.0
      %1041 = vmatpush2.msra.mxu0 0.0
      %1042 = vmatprep.subr.mxu0 0.0
      %1043 = vmatpush2.msra.mxu0 0.0
      %1044 = vmatprep.subr.mxu0 0.0
      %1045 = vmatpush2.msra.mxu0 0.0
      %1046 = vmatprep.subr.mxu0 0.0
      %1047 = vmatpush2.msra.mxu0 0.0
      %1048 = vmatprep.subr.mxu0 0.0
      %1049 = vmatpush2.msra.mxu0 0.0
      %1050 = vmatprep.subr.mxu0 0.0
      %1051 = vmatpush2.msra.mxu0 0.0
      %1052 = vmatprep.subr.mxu0 0.0
      %1053 = vmatpush2.msra.mxu0 0.0
      %1054 = vmatprep.subr.mxu0 0.0
      %1055 = vmatpush2.msra.mxu0 0.0
      %1056 = vmatprep.subr.mxu0 0.0
      %1057 = vmatpush2.msra.mxu0 0.0
      %1058 = vmatprep.mubr.f32.mxu0 0.0
      %1059 = vmatmul.mubr.f32.gmra.mxu0 %v992
      %v1060 = vpop.f32.mrf.mxu0
      %v1061 = vadd.f32 0.0, %v1060
      %v1062 = vpop.f32.mrf.mxu0
      %1063 = vdwg.mxu0
      %v1064 = vadd.f32 %v988, %v1061
      %v1065 = vld [vmem:[%s8] sm:$0x1]
      %v1067 = vlaneseq
      %v1068 = vshrl.u32 %v1067, 7
      %v1069 = vsub.s32 0, %v1068
      %v1070 = vrot.slane %v1065, %v1069
      %v1072 = vadd.f32 %v1064, %v1070
      %v1073 = vtanh.pop %v1072
      %v1074 = vld [vmem:[%s9] sm:$0xff]
      %v1075 = vld [vmem:[%s9 + $0x8] sm:$0xff]
      %v1076 = vld [vmem:[%s9 + $0x10] sm:$0xff]
      %v1077 = vld [vmem:[%s9 + $0x18] sm:$0xff]
      %v1079 = vsel %vm435, %v1073, 0
      %1081 = vmatprep.subr.mxu0 0.0
      %1082 = vmatpush1.msra.mxu0 0.0
      %1083 = vmatprep.subr.mxu0 0.0
      %1084 = vmatpush1.msra.mxu0 0.0
      %1085 = vmatprep.subr.mxu0 0.0
      %1086 = vmatpush1.msra.mxu0 0.0
      %1087 = vmatprep.subr.mxu0 0.0
      %1088 = vmatpush1.msra.mxu0 0.0
      %1089 = vmatprep.subr.mxu0 0.0
      %1090 = vmatpush1.msra.mxu0 0.0
      %1091 = vmatprep.subr.mxu0 0.0
      %1092 = vmatpush1.msra.mxu0 0.0
      %1093 = vmatprep.subr.mxu0 0.0
      %1094 = vmatpush1.msra.mxu0 0.0
      %1095 = vmatprep.subr.mxu0 0.0
      %1096 = vmatpush1.msra.mxu0 0.0
      %1097 = vmatprep.subr.mxu0 0.0
      %1098 = vmatpush1.msra.mxu0 0.0
      %1099 = vmatprep.subr.mxu0 0.0
      %1100 = vmatpush1.msra.mxu0 0.0
      %1101 = vmatprep.subr.mxu0 0.0
      %1102 = vmatpush1.msra.mxu0 0.0
      %1103 = vmatprep.subr.mxu0 0.0
      %1104 = vmatpush1.msra.mxu0 0.0
      %1105 = vmatprep.subr.mxu0 0.0
      %1106 = vmatpush1.msra.mxu0 %v1077
      %1107 = vmatprep.subr.mxu0 0.0
      %1108 = vmatpush1.msra.mxu0 %v1076
      %1109 = vmatprep.subr.mxu0 0.0
      %1110 = vmatpush1.msra.mxu0 %v1075
      %1111 = vmatprep.subr.mxu0 0.0
      %1112 = vmatpush1.msra.mxu0 %v1074
      %1113 = vmatprep.subr.mxu0 0.0
      %1114 = vmatpush2.msra.mxu0 0.0
      %1115 = vmatprep.subr.mxu0 0.0
      %1116 = vmatpush2.msra.mxu0 0.0
      %1117 = vmatprep.subr.mxu0 0.0
      %1118 = vmatpush2.msra.mxu0 0.0
      %1119 = vmatprep.subr.mxu0 0.0
      %1120 = vmatpush2.msra.mxu0 0.0
      %1121 = vmatprep.subr.mxu0 0.0
      %1122 = vmatpush2.msra.mxu0 0.0
      %1123 = vmatprep.subr.mxu0 0.0
      %1124 = vmatpush2.msra.mxu0 0.0
      %1125 = vmatprep.subr.mxu0 0.0
      %1126 = vmatpush2.msra.mxu0 0.0
      %1127 = vmatprep.subr.mxu0 0.0
      %1128 = vmatpush2.msra.mxu0 0.0
      %1129 = vmatprep.subr.mxu0 0.0
      %1130 = vmatpush2.msra.mxu0 0.0
      %1131 = vmatprep.subr.mxu0 0.0
      %1132 = vmatpush2.msra.mxu0 0.0
      %1133 = vmatprep.subr.mxu0 0.0
      %1134 = vmatpush2.msra.mxu0 0.0
      %1135 = vmatprep.subr.mxu0 0.0
      %1136 = vmatpush2.msra.mxu0 0.0
      %1137 = vmatprep.subr.mxu0 0.0
      %1138 = vmatpush2.msra.mxu0 0.0
      %1139 = vmatprep.subr.mxu0 0.0
      %1140 = vmatpush2.msra.mxu0 0.0
      %1141 = vmatprep.subr.mxu0 0.0
      %1142 = vmatpush2.msra.mxu0 0.0
      %1143 = vmatprep.subr.mxu0 0.0
      %1144 = vmatpush2.msra.mxu0 0.0
      %1145 = vmatprep.mubr.f32.mxu0 0.0
      %1146 = vmatmul.mubr.f32.gmra.mxu0 %v1079
      %v1147 = vpop.f32.mrf.mxu0
      %v1148 = vadd.f32 0.0, %v1147
      %v1149 = vpop.f32.mrf.mxu0
      %1150 = vdwg.mxu0
      %vm1151 = vcmask 523264
      %v1152 = vsel %vm1151, %v1148, -inf
      %1153 = vmax.xlane.f32.xlu0 %v1152
      %v1154 = vpop.xlane.xlu0 %1153
      %v1155 = vsub.f32 %v1148, %v1154
      %v1156 = vmul.f32 %v1155, 1.442695
      %v1157 = vpow.pop %v1156
      %v1158 = vsel %vm1151, %v1157, 0.0
      %1159 = vadd.xlane.f32.xlu0 %v1158
      %v1160 = vpop.xlane.xlu0 %1159
      %v1161 = vlog2.pop %v1160
      %v1162 = vmul.f32 %v1161, 0.6931472
      %v1163 = vadd.f32 %v1154, %v1162
      %v1164 = vsub.f32 %v1148, %v1163
      %v1165 = vlaneseq
      %v1166 = vand.u32 %v1165, 127
      %1167 = vset.pattern.permute.xlu0 0
      %1168 = vperm.xlu0 %1167, %v430
      %v1169 = vpop.permute.xlu0 %1168
      %vm1170 = vcmp.eq.s32.totalorder %v1166, %v1169
      %v1171 = vsel %vm1170, 1, 0
      %v1172 = vcvt.s32.f32 %v1171
      %vm1173 = vcmp.ne.s32.totalorder %v430, 0
      %v1174 = vsel %vm1173, 1, 0
      %v1175 = vcvt.s32.f32 %v1174
      %v1176 = vmul.f32 %v1164, %v1172
      %v1177 = vsel %vm1151, %v1176, 0.0
      %1178 = vadd.xlane.f32.xlu0 %v1177
      %v1179 = vpop.xlane.xlu0 %1178
      %v1180 = vsub.f32 0.0, %v1179
      %v1181 = vmul.f32 %v1180, %v1175
      %vm1182 = vcmask 7168
      %v1183 = vsel %vm1182, %v1181, 0.0
      %v1184 = vrot.slane %v1183, 4
      %v1185 = vadd.f32 %v1183, %v1184
      %v1186 = vrot.slane %v1185, 2
      %v1187 = vadd.f32 %v1185, %v1186
      %v1188 = vrot.slane %v1187, 1
      %v1189 = vadd.f32 %v1187, %v1188
      %vm1190 = vcmask 0
      %1191 = vst.msk [vmem:[%s423] sm:$0x1] %vm1190, %v1189
      %p1192 = scmp.lt.s32.totalorder %s21, 1
      %s1193 = scalar_select %p1192, %s21, 1
      %s1194 = scalar_lea.vmem %s10, %s1193
      // Predicated region
      $region61: #{nmt_forward.5} parent=59 // pred_check
        %p1195 = pneg %p274
      $region62: #{nmt_forward.5} parent=59 // pred_check_branch
        %1197 = sbr.rel (%p1195) target = $region64
      $region63: #{nmt_forward.5} parent=59 // pred_region
        _
      $region64: #{nmt_forward.5} parent=59 // pred_fallthru
        _
    $region60: #{nmt_forward.5} parent=5 // pred_fallthru
      _
    %p1198 = scmp.le.s32.totalorder 2, %s16
    // Predicated region
    $region65: #{nmt_forward.5} parent=5 // pred_check
      %p1199 = pneg %p1198
    $region66: #{nmt_forward.5} parent=5 // pred_check_branch
      %1201 = sbr.rel (%p1199) target = $region68
    $region67: #{nmt_forward.5} parent=5 // pred_region
      %s1202 = ssub.s32 %s16, 2
      // Predicated region
      $region69: #{nmt_forward.5} parent=67 // pred_check
        %p1203 = pneg %p280
      $region70: #{nmt_forward.5} parent=67 // pred_check_branch
        %1205 = sbr.rel (%p1203) target = $region72
      $region71: #{nmt_forward.5} parent=67 // pred_region
        %p1206 = scmp.lt.s32.totalorder %s22, 1
        %s1207 = scalar_select %p1206, %s22, 1
        %s1208 = scalar_lea.vmem %s10, %s1207
      $region72: #{nmt_forward.5} parent=67 // pred_fallthru
        _
    $region68: #{nmt_forward.5} parent=5 // pred_fallthru
      _
  $region6: #{nmt_forward.5} parent=0 // loop_footer
    %s20 = sadd.s32 1, %s16
  $region7: #{nmt_forward.5} parent=0 // loop_footer_branch
    %15 = sbr.rel target = $region3
  $region8: #{nmt_forward.5} parent=0 // loop_exit
    _

</llo_original>
